<compile_context>
chip_gen: v7x
topology: tpu7x:2x2x1
jax: 0.10.0
libtpu: 0.0.40
codegen_flags: <defaults>
</compile_context>

<pallas_src>
import math
import numpy as np
import jax
import jax.numpy as jnp
from jax import lax
from jax.experimental import pallas as pl
from jax.experimental.pallas import tpu as pltpu

EPS = 1e-6
NEG_INF = -1000000000.0


def _compute_vmem_limit():
    # ~75% of physical VMEM (48 MiB on 64-MiB v7x, 96 MiB on 128-MiB v5e/v6e);
    # leave headroom for compiler-internal scratch. Fallback is safe everywhere.
    try:
        cap = int(pltpu.get_tpu_info().vmem_capacity_bytes)
    except Exception:
        cap = 64 * 1024 * 1024
    return min((cap * 3) // 4, 100 * 1024 * 1024)


_VMEM_LIMIT = _compute_vmem_limit()


def _layernorm(x, a, b):
    """Torch-style LayerNorm from the file: unbiased std, /(std + eps). f32."""
    d = x.shape[-1]
    mean = jnp.mean(x, axis=-1, keepdims=True)
    diff = x - mean
    var = jnp.sum(diff * diff, axis=-1, keepdims=True) * (1.0 / (d - 1))
    inv = pl.reciprocal(jnp.sqrt(var) + EPS, approx=True)   # EUP, off the VALU
    return a * (diff * inv) + b


# ---------------------------------------------------------------------------
# Fully fused Block kernel: N CTRNN sublayers + causal MHA + FFN, LN fused,
# residuals in-register. One grid step == one batch element.
# ---------------------------------------------------------------------------
def _make_block_kernel(N, ksize, n_heads):
    def kernel(x_ref,
               rln_a_ref, rln_b_ref, rw_ref, rwi_ref, rbias_ref, rit_ref,
               c0a_ref, c0b_ref, wqkv_ref, bqkv_ref, wo_ref, bo_ref,
               c1a_ref, c1b_ref, w1_ref, b1_ref, w2_ref, b2_ref,
               o_ref):
        x = x_ref[0].astype(jnp.float32)          # (l, d) residual stream, f32
        l, d = x.shape
        dk = d // n_heads

        # ---- N LocalRNN (CTRNN over causal windows of ksize), LN fused ----
        row = lax.broadcasted_iota(jnp.int32, (l, d), 0)
        for layer in range(N):                    # static; weights VMEM-resident
            xn = _layernorm(x, rln_a_ref[layer], rln_b_ref[layer])
            # Hoisted input projection: one matmul feeds all ksize window slots.
            u = jnp.dot(xn.astype(jnp.bfloat16), rwi_ref[layer],
                        preferred_element_type=jnp.float32)
            w = rw_ref[layer]                     # (d, d) bf16 recurrent weight
            bias = rbias_ref[layer]               # (1, d) -> VPU sublane broadcast
            inv_tau = rit_ref[layer]              # (1, d)
            h = None
            for k in range(ksize):                # small static loop (unrolled)
                shift = ksize - 1 - k             # window row t uses xn[t - shift]
                if shift == 0:
                    uk = u
                else:
                    uk = jnp.where(row >= shift,
                                   pltpu.roll(u, shift=shift, axis=0), 0.0)
                if h is None:                     # h0 = 0: skip h @ W
                    h = inv_tau * jnp.maximum(uk + bias, 0.0)
                else:
                    pre = jnp.dot(h.astype(jnp.bfloat16), w,
                                  preferred_element_type=jnp.float32) + uk + bias
                    h = h + inv_tau * (-h + jnp.maximum(pre, 0.0))
            x = x + h                             # SublayerConnection residual

        # ---- MHPooling (causal multi-head attention), LN fused ----
        # TODO(synk): for long sequences switch to flash-style q/kv tiling with
        # online softmax instead of the full (l, l) score matrix.
        xn = _layernorm(x, c0a_ref[...], c0b_ref[...])
        qkv = jnp.dot(xn.astype(jnp.bfloat16), wqkv_ref[...],
                      preferred_element_type=jnp.float32) + bqkv_ref[...]
        rowi = lax.broadcasted_iota(jnp.int32, (l, l), 0)
        coli = lax.broadcasted_iota(jnp.int32, (l, l), 1)
        allowed = coli <= rowi                    # causal (subsequent_mask == 0)
        scale = 1.0 / math.sqrt(dk)
        ctx_heads = []
        for hh in range(n_heads):
            qh = qkv[:, hh * dk:(hh + 1) * dk].astype(jnp.bfloat16)
            kh = qkv[:, d + hh * dk:d + (hh + 1) * dk].astype(jnp.bfloat16)
            vh = qkv[:, 2 * d + hh * dk:2 * d + (hh + 1) * dk].astype(jnp.bfloat16)
            s = lax.dot_general(qh, kh, (((1,), (1,)), ((), ())),
                                preferred_element_type=jnp.float32) * scale
            s = jnp.where(allowed, s, NEG_INF)    # mask applied to f32 scores
            m = jnp.max(s, axis=-1, keepdims=True)
            e = jnp.exp(s - m)
            p = e * pl.reciprocal(jnp.sum(e, axis=-1, keepdims=True), approx=True)
            ctx_heads.append(jnp.dot(p.astype(jnp.bfloat16), vh,
                                     preferred_element_type=jnp.float32))
        ctx = jnp.concatenate(ctx_heads, axis=-1)         # (l, d)
        x = x + (jnp.dot(ctx.astype(jnp.bfloat16), wo_ref[...],
                         preferred_element_type=jnp.float32) + bo_ref[...])

        # ---- PositionwiseFeedForward, LN fused ----
        xn = _layernorm(x, c1a_ref[...], c1b_ref[...])
        hdd = jnp.maximum(
            jnp.dot(xn.astype(jnp.bfloat16), w1_ref[...],
                    preferred_element_type=jnp.float32) + b1_ref[...], 0.0)
        x = x + (jnp.dot(hdd.astype(jnp.bfloat16), w2_ref[...],
                         preferred_element_type=jnp.float32) + b2_ref[...])

        o_ref[0] = x.astype(o_ref.dtype)
    return kernel


def block_forward(x, dev, *, N, ksize, n_heads):
    """Single fused pallas_call for the whole Block. Grid = batch (parallel).

    NOTE(v7x): with n >= 2 both TensorCores get work; for n == 1 inference a
    q-block parallel axis (flash tiling) would be needed to use both cores."""
    n, l, d = x.shape
    vmem_spec = pl.BlockSpec(memory_space=pltpu.MemorySpace.VMEM)  # whole array,
    # resident in VMEM, single copy (no per-step double buffering of weights).
    return pl.pallas_call(
        _make_block_kernel(N, ksize, n_heads),
        out_shape=jax.ShapeDtypeStruct((n, l, d), x.dtype),
        grid=(n,),
        in_specs=[pl.BlockSpec((1, l, d), lambda i: (i, 0, 0))] + [vmem_spec] * 18,
        out_specs=pl.BlockSpec((1, l, d), lambda i: (i, 0, 0)),
        input_output_aliases={0: 0},
        compiler_params=pltpu.CompilerParams(
            dimension_semantics=("parallel",),
            vmem_limit_bytes=_VMEM_LIMIT),
    )(x,
      dev["rnn_ln_a"], dev["rnn_ln_b"], dev["rnn_w"], dev["rnn_wi"],
      dev["rnn_bias"], dev["rnn_inv_tau"],
      dev["conn0_a"], dev["conn0_b"], dev["wqkv"], dev["bqkv"], dev["wo"], dev["bo"],
      dev["conn1_a"], dev["conn1_b"], dev["w1"], dev["b1"], dev["w2"], dev["b2"])


# ---------------------------------------------------------------------------
# One-time host-side packing for the fused kernel: stack the N CTRNN layers,
# fuse Wq/Wk/Wv into Wqkv, cast MXU weight operands to bf16. Done once, not
# per traced call.
# ---------------------------------------------------------------------------
def prepare_block_params(params):
    L = params["layers"]
    pp, fp = params["pool"], params["ffn"]
    return dict(
        rnn_ln_a=jnp.stack([lp["ln_a"] for lp in L]),                 # (N,1,d) f32
        rnn_ln_b=jnp.stack([lp["ln_b"] for lp in L]),
        rnn_w=jnp.stack([lp["W"] for lp in L]).astype(jnp.bfloat16),  # (N,d,d)
        rnn_wi=jnp.stack([lp["Wi"] for lp in L]).astype(jnp.bfloat16),
        rnn_bias=jnp.stack([lp["bias"] for lp in L]),                 # (N,1,d) f32
        rnn_inv_tau=jnp.stack([lp["inv_tau"] for lp in L]),
        conn0_a=params["conn0_a"], conn0_b=params["conn0_b"],
        wqkv=jnp.concatenate([pp["wq"], pp["wk"], pp["wv"]],
                             axis=1).astype(jnp.bfloat16),            # (d,3d)
        bqkv=jnp.concatenate([pp["bq"], pp["bk"], pp["bv"]], axis=1), # (1,3d) f32
        wo=pp["wo"].astype(jnp.bfloat16), bo=pp["bo"],
        conn1_a=params["conn1_a"], conn1_b=params["conn1_b"],
        w1=fp["w1"].astype(jnp.bfloat16), b1=fp["b1"],
        w2=fp["w2"].astype(jnp.bfloat16), b2=fp["b2"],
    )


# ---------------------------------------------------------------------------
# Deterministic parameter init (shapes from Block.__init__; scaled for stability).
# Linear weights are stored as (in_features, out_features), i.e. torch W^T.
# Weights are snapped to bf16-representable values so the bf16 MXU path and the
# f32 reference see numerically identical parameters.
# ---------------------------------------------------------------------------
def init_block_params(key, d_model, ksize, N, n_heads):
    d = d_model
    keys = jax.random.split(key, 4 * N + 16)
    it = iter(keys)

    def nrm(shape, scale):
        w = scale * jax.random.normal(next(it), shape, jnp.float32)
        return w.astype(jnp.bfloat16).astype(jnp.float32)

    layers = []
    for _ in range(N):
        tau = 0.5 + jnp.abs(nrm((1, d), 1.0))   # tau = |randn| (offset for demo stability)
        layers.append(dict(
            ln_a=jnp.ones((1, d), jnp.float32),
            ln_b=jnp.zeros((1, d), jnp.float32),
            W=nrm((d, d), 1.0 / math.sqrt(d)),       # CTRNN recurrent weight
            Wi=nrm((d, d), 1.0 / math.sqrt(d)),      # CTRNN input weight
            bias=nrm((1, d), 0.1),
            inv_tau=1.0 / tau,                       # forward uses 1/tau
        ))
    pool = dict(
        wq=nrm((d, d), 1.0 / math.sqrt(d)), bq=nrm((1, d), 0.1),
        wk=nrm((d, d), 1.0 / math.sqrt(d)), bk=nrm((1, d), 0.1),
        wv=nrm((d, d), 1.0 / math.sqrt(d)), bv=nrm((1, d), 0.1),
        wo=nrm((d, d), 1.0 / math.sqrt(d)), bo=nrm((1, d), 0.1),
    )
    ffn = dict(
        w1=nrm((d, 4 * d), 1.0 / math.sqrt(d)),     b1=nrm((1, 4 * d), 0.1),
        w2=nrm((4 * d, d), 1.0 / math.sqrt(4 * d)), b2=nrm((1, d), 0.1),
    )
    return dict(layers=layers, pool=pool, ffn=ffn,
                conn0_a=jnp.ones((1, d), jnp.float32), conn0_b=jnp.zeros((1, d), jnp.float32),
                conn1_a=jnp.ones((1, d), jnp.float32), conn1_b=jnp.zeros((1, d), jnp.float32))


# ---------------------------------------------------------------------------
# Pure-JAX f32 reference (mirrors the PyTorch forward exactly, eval mode)
# ---------------------------------------------------------------------------
def block_reference(x, params, *, ksize, n_heads):
    def ln(y, a, b):
        mean = y.mean(-1, keepdims=True)
        var = ((y - mean) ** 2).sum(-1, keepdims=True) / (y.shape[-1] - 1)
        std = jnp.sqrt(var)
        return a[0] * (y - mean) / (std + EPS) + b[0]

    n, l, d = x.shape
    for lp in params["layers"]:
        xn = ln(x, lp["ln_a"], lp["ln_b"])
        pad = jnp.zeros((n, ksize - 1, d), x.dtype)
        xp = jnp.concatenate([pad, xn], axis=1)
        idx = jnp.arange(l)[:, None] + jnp.arange(ksize)[None, :]
        win = xp[:, idx, :]                     # (n, l, ksize, d)
        h = jnp.zeros((n, l, d), x.dtype)
        for k in range(ksize):
            pre = h @ lp["W"] + win[:, :, k, :] @ lp["Wi"] + lp["bias"][0]
            h = h + lp["inv_tau"][0] * (-h + jnp.maximum(pre, 0.0))
        x = x + h

    pp = params["pool"]
    xn = ln(x, params["conn0_a"], params["conn0_b"])
    dk = d // n_heads
    q = (xn @ pp["wq"] + pp["bq"][0]).reshape(n, l, n_heads, dk).transpose(0, 2, 1, 3)
    k = (xn @ pp["wk"] + pp["bk"][0]).reshape(n, l, n_heads, dk).transpose(0, 2, 1, 3)
    v = (xn @ pp["wv"] + pp["bv"][0]).reshape(n, l, n_heads, dk).transpose(0, 2, 1, 3)
    s = jnp.einsum("bhqd,bhkd->bhqk", q, k) / math.sqrt(dk)
    mask = jnp.tril(jnp.ones((l, l), bool))
    s = jnp.where(mask, s, NEG_INF)
    p = jax.nn.softmax(s, axis=-1)
    ctx = jnp.einsum("bhqk,bhkd->bhqd", p, v).transpose(0, 2, 1, 3).reshape(n, l, d)
    x = x + (ctx @ pp["wo"] + pp["bo"][0])

    fp = params["ffn"]
    xn = ln(x, params["conn1_a"], params["conn1_b"])
    hdd = jnp.maximum(xn @ fp["w1"] + fp["b1"][0], 0.0)
    x = x + (hdd @ fp["w2"] + fp["b2"][0])
    return x


if __name__ == "__main__":
    # Block(input_dim=32, output_dim=32, rnn_type='CTRNN', ksize=3, N=2, h=4, dropout=0.1)
    n, l, d = 2, 8, 32
    ksize, N, n_heads = 3, 2, 4

    key = jax.random.PRNGKey(0)
    kx, kp = jax.random.split(key)
    x = jax.random.normal(kx, (n, l, d), jnp.float32)
    params = init_block_params(kp, d, ksize, N, n_heads)
    dev = prepare_block_params(params)          # one-time packing for the kernel

    block_fn = jax.jit(block_forward, static_argnames=("N", "ksize", "n_heads"))
    out = jax.block_until_ready(block_fn(x, dev, N=N, ksize=ksize, n_heads=n_heads))

    ref = block_reference(x, params, ksize=ksize, n_heads=n_heads)
    # Kernel matmuls run on the bf16 MXU with f32 accumulation (LN / softmax /
    # residuals in f32); tolerance sized for that.
    np.testing.assert_allclose(np.asarray(out), np.asarray(ref), rtol=4e-2, atol=4e-2)

    print("KERNEL_OK")
</pallas_src>

<mosaic_0001>
module attributes {stable_mosaic.version = 11 : i64} {
  func.func @kernel(%arg0: i32, %arg1: memref<1x8x32xf32, #tpu.memory_space<vmem>>, %arg2: memref<2x1x32xf32, #tpu.memory_space<vmem>>, %arg3: memref<2x1x32xf32, #tpu.memory_space<vmem>>, %arg4: memref<2x32x32xbf16, #tpu.memory_space<vmem>>, %arg5: memref<2x32x32xbf16, #tpu.memory_space<vmem>>, %arg6: memref<2x1x32xf32, #tpu.memory_space<vmem>>, %arg7: memref<2x1x32xf32, #tpu.memory_space<vmem>>, %arg8: memref<1x32xf32, #tpu.memory_space<vmem>>, %arg9: memref<1x32xf32, #tpu.memory_space<vmem>>, %arg10: memref<32x96xbf16, #tpu.memory_space<vmem>>, %arg11: memref<1x96xf32, #tpu.memory_space<vmem>>, %arg12: memref<32x32xbf16, #tpu.memory_space<vmem>>, %arg13: memref<1x32xf32, #tpu.memory_space<vmem>>, %arg14: memref<1x32xf32, #tpu.memory_space<vmem>>, %arg15: memref<1x32xf32, #tpu.memory_space<vmem>>, %arg16: memref<32x128xbf16, #tpu.memory_space<vmem>>, %arg17: memref<1x128xf32, #tpu.memory_space<vmem>>, %arg18: memref<128x32xbf16, #tpu.memory_space<vmem>>, %arg19: memref<1x32xf32, #tpu.memory_space<vmem>>, %arg20: memref<1x8x32xf32, #tpu.memory_space<vmem>>) attributes {dimension_semantics = [#tpu.dimension_semantics<parallel>], iteration_bounds = array<i64: 2>, scalar_prefetch = 0 : i64, scratch_operands = 0 : i64, tpu.core_type = #tpu.core_type<tc>, window_params = [{transform_indices = @transform_0, window_bounds = array<i64: 1, 8, 32>}, {pipeline_mode = #tpu.pipeline_mode<synchronous>, transform_indices = @transform_1, window_bounds = array<i64: 2, 1, 32>}, {pipeline_mode = #tpu.pipeline_mode<synchronous>, transform_indices = @transform_2, window_bounds = array<i64: 2, 1, 32>}, {pipeline_mode = #tpu.pipeline_mode<synchronous>, transform_indices = @transform_3, window_bounds = array<i64: 2, 32, 32>}, {pipeline_mode = #tpu.pipeline_mode<synchronous>, transform_indices = @transform_4, window_bounds = array<i64: 2, 32, 32>}, {pipeline_mode = #tpu.pipeline_mode<synchronous>, transform_indices = @transform_5, window_bounds = array<i64: 2, 1, 32>}, {pipeline_mode = #tpu.pipeline_mode<synchronous>, transform_indices = @transform_6, window_bounds = array<i64: 2, 1, 32>}, {pipeline_mode = #tpu.pipeline_mode<synchronous>, transform_indices = @transform_7, window_bounds = array<i64: 1, 32>}, {pipeline_mode = #tpu.pipeline_mode<synchronous>, transform_indices = @transform_8, window_bounds = array<i64: 1, 32>}, {pipeline_mode = #tpu.pipeline_mode<synchronous>, transform_indices = @transform_9, window_bounds = array<i64: 32, 96>}, {pipeline_mode = #tpu.pipeline_mode<synchronous>, transform_indices = @transform_10, window_bounds = array<i64: 1, 96>}, {pipeline_mode = #tpu.pipeline_mode<synchronous>, transform_indices = @transform_11, window_bounds = array<i64: 32, 32>}, {pipeline_mode = #tpu.pipeline_mode<synchronous>, transform_indices = @transform_12, window_bounds = array<i64: 1, 32>}, {pipeline_mode = #tpu.pipeline_mode<synchronous>, transform_indices = @transform_13, window_bounds = array<i64: 1, 32>}, {pipeline_mode = #tpu.pipeline_mode<synchronous>, transform_indices = @transform_14, window_bounds = array<i64: 1, 32>}, {pipeline_mode = #tpu.pipeline_mode<synchronous>, transform_indices = @transform_15, window_bounds = array<i64: 32, 128>}, {pipeline_mode = #tpu.pipeline_mode<synchronous>, transform_indices = @transform_16, window_bounds = array<i64: 1, 128>}, {pipeline_mode = #tpu.pipeline_mode<synchronous>, transform_indices = @transform_17, window_bounds = array<i64: 128, 32>}, {pipeline_mode = #tpu.pipeline_mode<synchronous>, transform_indices = @transform_18, window_bounds = array<i64: 1, 32>}, {transform_indices = @transform_19, window_bounds = array<i64: 1, 8, 32>}]} {
    %c0 = arith.constant 0 : index
    %c0_0 = arith.constant 0 : index
    %c0_1 = arith.constant 0 : index
    %0 = vector.load %arg1[%c0, %c0_0, %c0_1] : memref<1x8x32xf32, #tpu.memory_space<vmem>>, vector<1x8x32xf32>
    %1 = vector.shape_cast %0 : vector<1x8x32xf32> to vector<8x32xf32>
    %2 = tpu.iota {dimensions = array<i32: 0>} : vector<8x32xi32>
    %c0_2 = arith.constant 0 : index
    %c0_3 = arith.constant 0 : index
    %c0_4 = arith.constant 0 : index
    %3 = vector.load %arg2[%c0_2, %c0_3, %c0_4] : memref<2x1x32xf32, #tpu.memory_space<vmem>>, vector<1x1x32xf32>
    %4 = vector.shape_cast %3 : vector<1x1x32xf32> to vector<1x32xf32>
    %c0_5 = arith.constant 0 : index
    %c0_6 = arith.constant 0 : index
    %c0_7 = arith.constant 0 : index
    %5 = vector.load %arg3[%c0_5, %c0_6, %c0_7] : memref<2x1x32xf32, #tpu.memory_space<vmem>>, vector<1x1x32xf32>
    %6 = vector.shape_cast %5 : vector<1x1x32xf32> to vector<1x32xf32>
    %cst = arith.constant dense<0.000000e+00> : vector<8xf32>
    %7 = vector.multi_reduction <add>, %1, %cst [1] : vector<8x32xf32> to vector<8xf32>
    %8 = vector.shape_cast %7 : vector<8xf32> to vector<8x1xf32>
    %cst_8 = arith.constant 3.200000e+01 : f32
    %9 = vector.broadcast %cst_8 : f32 to vector<8x1xf32>
    %10 = arith.divf %8, %9 : vector<8x1xf32>
    %11 = vector.broadcast %10 : vector<8x1xf32> to vector<8x32xf32>
    %12 = arith.subf %1, %11 : vector<8x32xf32>
    %13 = arith.mulf %12, %12 : vector<8x32xf32>
    %cst_9 = arith.constant dense<0.000000e+00> : vector<8xf32>
    %14 = vector.multi_reduction <add>, %13, %cst_9 [1] : vector<8x32xf32> to vector<8xf32>
    %15 = vector.shape_cast %14 : vector<8xf32> to vector<8x1xf32>
    %cst_10 = arith.constant 0.0322580636 : f32
    %16 = vector.broadcast %cst_10 : f32 to vector<8x1xf32>
    %17 = arith.mulf %15, %16 : vector<8x1xf32>
    %18 = math.sqrt %17 : vector<8x1xf32>
    %cst_11 = arith.constant 9.99999997E-7 : f32
    %19 = vector.broadcast %cst_11 : f32 to vector<8x1xf32>
    %20 = arith.addf %18, %19 : vector<8x1xf32>
    %21 = tpu.reciprocal %20 {approx = true} : vector<8x1xf32> -> vector<8x1xf32>
    %22 = vector.broadcast %21 : vector<8x1xf32> to vector<8x32xf32>
    %23 = arith.mulf %12, %22 : vector<8x32xf32>
    %24 = vector.broadcast %4 : vector<1x32xf32> to vector<8x32xf32>
    %25 = arith.mulf %24, %23 : vector<8x32xf32>
    %26 = vector.broadcast %6 : vector<1x32xf32> to vector<8x32xf32>
    %27 = arith.addf %25, %26 : vector<8x32xf32>
    %28 = arith.truncf %27 : vector<8x32xf32> to vector<8x32xbf16>
    %c0_12 = arith.constant 0 : index
    %c0_13 = arith.constant 0 : index
    %c0_14 = arith.constant 0 : index
    %29 = vector.load %arg5[%c0_12, %c0_13, %c0_14] : memref<2x32x32xbf16, #tpu.memory_space<vmem>>, vector<1x32x32xbf16>
    %30 = vector.shape_cast %29 : vector<1x32x32xbf16> to vector<32x32xbf16>
    %cst_15 = arith.constant dense<0.000000e+00> : vector<8x32xf32>
    %31 = tpu.matmul %28, %30, %cst_15 {dimension_numbers = #tpu.dot_dimension_numbers<[1], [0], [0], [1], [0, 0, 1, 1], [], []>} : vector<8x32xbf16>, vector<32x32xbf16>, vector<8x32xf32> -> vector<8x32xf32>
    %c0_16 = arith.constant 0 : index
    %c0_17 = arith.constant 0 : index
    %c0_18 = arith.constant 0 : index
    %32 = vector.load %arg4[%c0_16, %c0_17, %c0_18] : memref<2x32x32xbf16, #tpu.memory_space<vmem>>, vector<1x32x32xbf16>
    %33 = vector.shape_cast %32 : vector<1x32x32xbf16> to vector<32x32xbf16>
    %c0_19 = arith.constant 0 : index
    %c0_20 = arith.constant 0 : index
    %c0_21 = arith.constant 0 : index
    %34 = vector.load %arg6[%c0_19, %c0_20, %c0_21] : memref<2x1x32xf32, #tpu.memory_space<vmem>>, vector<1x1x32xf32>
    %35 = vector.shape_cast %34 : vector<1x1x32xf32> to vector<1x32xf32>
    %c0_22 = arith.constant 0 : index
    %c0_23 = arith.constant 0 : index
    %c0_24 = arith.constant 0 : index
    %36 = vector.load %arg7[%c0_22, %c0_23, %c0_24] : memref<2x1x32xf32, #tpu.memory_space<vmem>>, vector<1x1x32xf32>
    %37 = vector.shape_cast %36 : vector<1x1x32xf32> to vector<1x32xf32>
    %c2_i32 = arith.constant 2 : i32
    %38 = vector.broadcast %c2_i32 : i32 to vector<8x32xi32>
    %39 = arith.cmpi sge, %2, %38 : vector<8x32xi32>
    %c2_i32_25 = arith.constant 2 : i32
    %40 = tpu.dynamic_rotate %31 by %c2_i32_25 dim 0 : vector<8x32xf32>, i32 -> vector<8x32xf32>
    %cst_26 = arith.constant 0.000000e+00 : f32
    %41 = vector.broadcast %cst_26 : f32 to vector<8x32xf32>
    %42 = arith.select %39, %40, %41 : vector<8x32xi1>, vector<8x32xf32>
    %43 = vector.broadcast %35 : vector<1x32xf32> to vector<8x32xf32>
    %44 = arith.addf %42, %43 : vector<8x32xf32>
    %cst_27 = arith.constant 0.000000e+00 : f32
    %45 = vector.broadcast %cst_27 : f32 to vector<8x32xf32>
    %46 = arith.maximumf %44, %45 : vector<8x32xf32>
    %47 = vector.broadcast %37 : vector<1x32xf32> to vector<8x32xf32>
    %48 = arith.mulf %47, %46 : vector<8x32xf32>
    %c1_i32 = arith.constant 1 : i32
    %49 = vector.broadcast %c1_i32 : i32 to vector<8x32xi32>
    %50 = arith.cmpi sge, %2, %49 : vector<8x32xi32>
    %c1_i32_28 = arith.constant 1 : i32
    %51 = tpu.dynamic_rotate %31 by %c1_i32_28 dim 0 : vector<8x32xf32>, i32 -> vector<8x32xf32>
    %cst_29 = arith.constant 0.000000e+00 : f32
    %52 = vector.broadcast %cst_29 : f32 to vector<8x32xf32>
    %53 = arith.select %50, %51, %52 : vector<8x32xi1>, vector<8x32xf32>
    %54 = arith.truncf %48 : vector<8x32xf32> to vector<8x32xbf16>
    %cst_30 = arith.constant dense<0.000000e+00> : vector<8x32xf32>
    %55 = tpu.matmul %54, %33, %cst_30 {dimension_numbers = #tpu.dot_dimension_numbers<[1], [0], [0], [1], [0, 0, 1, 1], [], []>} : vector<8x32xbf16>, vector<32x32xbf16>, vector<8x32xf32> -> vector<8x32xf32>
    %56 = arith.addf %55, %53 : vector<8x32xf32>
    %57 = vector.broadcast %35 : vector<1x32xf32> to vector<8x32xf32>
    %58 = arith.addf %56, %57 : vector<8x32xf32>
    %cst_31 = arith.constant 0.000000e+00 : f32
    %59 = vector.broadcast %cst_31 : f32 to vector<8x32xf32>
    %60 = arith.subf %59, %48 : vector<8x32xf32>
    %cst_32 = arith.constant 0.000000e+00 : f32
    %61 = vector.broadcast %cst_32 : f32 to vector<8x32xf32>
    %62 = arith.maximumf %58, %61 : vector<8x32xf32>
    %63 = arith.addf %60, %62 : vector<8x32xf32>
    %64 = vector.broadcast %37 : vector<1x32xf32> to vector<8x32xf32>
    %65 = arith.mulf %64, %63 : vector<8x32xf32>
    %66 = arith.addf %48, %65 : vector<8x32xf32>
    %67 = arith.truncf %66 : vector<8x32xf32> to vector<8x32xbf16>
    %cst_33 = arith.constant dense<0.000000e+00> : vector<8x32xf32>
    %68 = tpu.matmul %67, %33, %cst_33 {dimension_numbers = #tpu.dot_dimension_numbers<[1], [0], [0], [1], [0, 0, 1, 1], [], []>} : vector<8x32xbf16>, vector<32x32xbf16>, vector<8x32xf32> -> vector<8x32xf32>
    %69 = arith.addf %68, %31 : vector<8x32xf32>
    %70 = vector.broadcast %35 : vector<1x32xf32> to vector<8x32xf32>
    %71 = arith.addf %69, %70 : vector<8x32xf32>
    %cst_34 = arith.constant 0.000000e+00 : f32
    %72 = vector.broadcast %cst_34 : f32 to vector<8x32xf32>
    %73 = arith.subf %72, %66 : vector<8x32xf32>
    %cst_35 = arith.constant 0.000000e+00 : f32
    %74 = vector.broadcast %cst_35 : f32 to vector<8x32xf32>
    %75 = arith.maximumf %71, %74 : vector<8x32xf32>
    %76 = arith.addf %73, %75 : vector<8x32xf32>
    %77 = vector.broadcast %37 : vector<1x32xf32> to vector<8x32xf32>
    %78 = arith.mulf %77, %76 : vector<8x32xf32>
    %79 = arith.addf %66, %78 : vector<8x32xf32>
    %80 = arith.addf %1, %79 : vector<8x32xf32>
    %c1 = arith.constant 1 : index
    %c0_36 = arith.constant 0 : index
    %c0_37 = arith.constant 0 : index
    %81 = vector.load %arg2[%c1, %c0_36, %c0_37] : memref<2x1x32xf32, #tpu.memory_space<vmem>>, vector<1x1x32xf32>
    %82 = vector.shape_cast %81 : vector<1x1x32xf32> to vector<1x32xf32>
    %c1_38 = arith.constant 1 : index
    %c0_39 = arith.constant 0 : index
    %c0_40 = arith.constant 0 : index
    %83 = vector.load %arg3[%c1_38, %c0_39, %c0_40] : memref<2x1x32xf32, #tpu.memory_space<vmem>>, vector<1x1x32xf32>
    %84 = vector.shape_cast %83 : vector<1x1x32xf32> to vector<1x32xf32>
    %cst_41 = arith.constant dense<0.000000e+00> : vector<8xf32>
    %85 = vector.multi_reduction <add>, %80, %cst_41 [1] : vector<8x32xf32> to vector<8xf32>
    %86 = vector.shape_cast %85 : vector<8xf32> to vector<8x1xf32>
    %cst_42 = arith.constant 3.200000e+01 : f32
    %87 = vector.broadcast %cst_42 : f32 to vector<8x1xf32>
    %88 = arith.divf %86, %87 : vector<8x1xf32>
    %89 = vector.broadcast %88 : vector<8x1xf32> to vector<8x32xf32>
    %90 = arith.subf %80, %89 : vector<8x32xf32>
    %91 = arith.mulf %90, %90 : vector<8x32xf32>
    %cst_43 = arith.constant dense<0.000000e+00> : vector<8xf32>
    %92 = vector.multi_reduction <add>, %91, %cst_43 [1] : vector<8x32xf32> to vector<8xf32>
    %93 = vector.shape_cast %92 : vector<8xf32> to vector<8x1xf32>
    %cst_44 = arith.constant 0.0322580636 : f32
    %94 = vector.broadcast %cst_44 : f32 to vector<8x1xf32>
    %95 = arith.mulf %93, %94 : vector<8x1xf32>
    %96 = math.sqrt %95 : vector<8x1xf32>
    %cst_45 = arith.constant 9.99999997E-7 : f32
    %97 = vector.broadcast %cst_45 : f32 to vector<8x1xf32>
    %98 = arith.addf %96, %97 : vector<8x1xf32>
    %99 = tpu.reciprocal %98 {approx = true} : vector<8x1xf32> -> vector<8x1xf32>
    %100 = vector.broadcast %99 : vector<8x1xf32> to vector<8x32xf32>
    %101 = arith.mulf %90, %100 : vector<8x32xf32>
    %102 = vector.broadcast %82 : vector<1x32xf32> to vector<8x32xf32>
    %103 = arith.mulf %102, %101 : vector<8x32xf32>
    %104 = vector.broadcast %84 : vector<1x32xf32> to vector<8x32xf32>
    %105 = arith.addf %103, %104 : vector<8x32xf32>
    %106 = arith.truncf %105 : vector<8x32xf32> to vector<8x32xbf16>
    %c1_46 = arith.constant 1 : index
    %c0_47 = arith.constant 0 : index
    %c0_48 = arith.constant 0 : index
    %107 = vector.load %arg5[%c1_46, %c0_47, %c0_48] : memref<2x32x32xbf16, #tpu.memory_space<vmem>>, vector<1x32x32xbf16>
    %108 = vector.shape_cast %107 : vector<1x32x32xbf16> to vector<32x32xbf16>
    %cst_49 = arith.constant dense<0.000000e+00> : vector<8x32xf32>
    %109 = tpu.matmul %106, %108, %cst_49 {dimension_numbers = #tpu.dot_dimension_numbers<[1], [0], [0], [1], [0, 0, 1, 1], [], []>} : vector<8x32xbf16>, vector<32x32xbf16>, vector<8x32xf32> -> vector<8x32xf32>
    %c1_50 = arith.constant 1 : index
    %c0_51 = arith.constant 0 : index
    %c0_52 = arith.constant 0 : index
    %110 = vector.load %arg4[%c1_50, %c0_51, %c0_52] : memref<2x32x32xbf16, #tpu.memory_space<vmem>>, vector<1x32x32xbf16>
    %111 = vector.shape_cast %110 : vector<1x32x32xbf16> to vector<32x32xbf16>
    %c1_53 = arith.constant 1 : index
    %c0_54 = arith.constant 0 : index
    %c0_55 = arith.constant 0 : index
    %112 = vector.load %arg6[%c1_53, %c0_54, %c0_55] : memref<2x1x32xf32, #tpu.memory_space<vmem>>, vector<1x1x32xf32>
    %113 = vector.shape_cast %112 : vector<1x1x32xf32> to vector<1x32xf32>
    %c1_56 = arith.constant 1 : index
    %c0_57 = arith.constant 0 : index
    %c0_58 = arith.constant 0 : index
    %114 = vector.load %arg7[%c1_56, %c0_57, %c0_58] : memref<2x1x32xf32, #tpu.memory_space<vmem>>, vector<1x1x32xf32>
    %115 = vector.shape_cast %114 : vector<1x1x32xf32> to vector<1x32xf32>
    %c2_i32_59 = arith.constant 2 : i32
    %116 = vector.broadcast %c2_i32_59 : i32 to vector<8x32xi32>
    %117 = arith.cmpi sge, %2, %116 : vector<8x32xi32>
    %c2_i32_60 = arith.constant 2 : i32
    %118 = tpu.dynamic_rotate %109 by %c2_i32_60 dim 0 : vector<8x32xf32>, i32 -> vector<8x32xf32>
    %cst_61 = arith.constant 0.000000e+00 : f32
    %119 = vector.broadcast %cst_61 : f32 to vector<8x32xf32>
    %120 = arith.select %117, %118, %119 : vector<8x32xi1>, vector<8x32xf32>
    %121 = vector.broadcast %113 : vector<1x32xf32> to vector<8x32xf32>
    %122 = arith.addf %120, %121 : vector<8x32xf32>
    %cst_62 = arith.constant 0.000000e+00 : f32
    %123 = vector.broadcast %cst_62 : f32 to vector<8x32xf32>
    %124 = arith.maximumf %122, %123 : vector<8x32xf32>
    %125 = vector.broadcast %115 : vector<1x32xf32> to vector<8x32xf32>
    %126 = arith.mulf %125, %124 : vector<8x32xf32>
    %c1_i32_63 = arith.constant 1 : i32
    %127 = vector.broadcast %c1_i32_63 : i32 to vector<8x32xi32>
    %128 = arith.cmpi sge, %2, %127 : vector<8x32xi32>
    %c1_i32_64 = arith.constant 1 : i32
    %129 = tpu.dynamic_rotate %109 by %c1_i32_64 dim 0 : vector<8x32xf32>, i32 -> vector<8x32xf32>
    %cst_65 = arith.constant 0.000000e+00 : f32
    %130 = vector.broadcast %cst_65 : f32 to vector<8x32xf32>
    %131 = arith.select %128, %129, %130 : vector<8x32xi1>, vector<8x32xf32>
    %132 = arith.truncf %126 : vector<8x32xf32> to vector<8x32xbf16>
    %cst_66 = arith.constant dense<0.000000e+00> : vector<8x32xf32>
    %133 = tpu.matmul %132, %111, %cst_66 {dimension_numbers = #tpu.dot_dimension_numbers<[1], [0], [0], [1], [0, 0, 1, 1], [], []>} : vector<8x32xbf16>, vector<32x32xbf16>, vector<8x32xf32> -> vector<8x32xf32>
    %134 = arith.addf %133, %131 : vector<8x32xf32>
    %135 = vector.broadcast %113 : vector<1x32xf32> to vector<8x32xf32>
    %136 = arith.addf %134, %135 : vector<8x32xf32>
    %cst_67 = arith.constant 0.000000e+00 : f32
    %137 = vector.broadcast %cst_67 : f32 to vector<8x32xf32>
    %138 = arith.subf %137, %126 : vector<8x32xf32>
    %cst_68 = arith.constant 0.000000e+00 : f32
    %139 = vector.broadcast %cst_68 : f32 to vector<8x32xf32>
    %140 = arith.maximumf %136, %139 : vector<8x32xf32>
    %141 = arith.addf %138, %140 : vector<8x32xf32>
    %142 = vector.broadcast %115 : vector<1x32xf32> to vector<8x32xf32>
    %143 = arith.mulf %142, %141 : vector<8x32xf32>
    %144 = arith.addf %126, %143 : vector<8x32xf32>
    %145 = arith.truncf %144 : vector<8x32xf32> to vector<8x32xbf16>
    %cst_69 = arith.constant dense<0.000000e+00> : vector<8x32xf32>
    %146 = tpu.matmul %145, %111, %cst_69 {dimension_numbers = #tpu.dot_dimension_numbers<[1], [0], [0], [1], [0, 0, 1, 1], [], []>} : vector<8x32xbf16>, vector<32x32xbf16>, vector<8x32xf32> -> vector<8x32xf32>
    %147 = arith.addf %146, %109 : vector<8x32xf32>
    %148 = vector.broadcast %113 : vector<1x32xf32> to vector<8x32xf32>
    %149 = arith.addf %147, %148 : vector<8x32xf32>
    %cst_70 = arith.constant 0.000000e+00 : f32
    %150 = vector.broadcast %cst_70 : f32 to vector<8x32xf32>
    %151 = arith.subf %150, %144 : vector<8x32xf32>
    %cst_71 = arith.constant 0.000000e+00 : f32
    %152 = vector.broadcast %cst_71 : f32 to vector<8x32xf32>
    %153 = arith.maximumf %149, %152 : vector<8x32xf32>
    %154 = arith.addf %151, %153 : vector<8x32xf32>
    %155 = vector.broadcast %115 : vector<1x32xf32> to vector<8x32xf32>
    %156 = arith.mulf %155, %154 : vector<8x32xf32>
    %157 = arith.addf %144, %156 : vector<8x32xf32>
    %158 = arith.addf %80, %157 : vector<8x32xf32>
    %c0_72 = arith.constant 0 : index
    %c0_73 = arith.constant 0 : index
    %159 = vector.load %arg8[%c0_72, %c0_73] : memref<1x32xf32, #tpu.memory_space<vmem>>, vector<1x32xf32>
    %c0_74 = arith.constant 0 : index
    %c0_75 = arith.constant 0 : index
    %160 = vector.load %arg9[%c0_74, %c0_75] : memref<1x32xf32, #tpu.memory_space<vmem>>, vector<1x32xf32>
    %cst_76 = arith.constant dense<0.000000e+00> : vector<8xf32>
    %161 = vector.multi_reduction <add>, %158, %cst_76 [1] : vector<8x32xf32> to vector<8xf32>
    %162 = vector.shape_cast %161 : vector<8xf32> to vector<8x1xf32>
    %cst_77 = arith.constant 3.200000e+01 : f32
    %163 = vector.broadcast %cst_77 : f32 to vector<8x1xf32>
    %164 = arith.divf %162, %163 : vector<8x1xf32>
    %165 = vector.broadcast %164 : vector<8x1xf32> to vector<8x32xf32>
    %166 = arith.subf %158, %165 : vector<8x32xf32>
    %167 = arith.mulf %166, %166 : vector<8x32xf32>
    %cst_78 = arith.constant dense<0.000000e+00> : vector<8xf32>
    %168 = vector.multi_reduction <add>, %167, %cst_78 [1] : vector<8x32xf32> to vector<8xf32>
    %169 = vector.shape_cast %168 : vector<8xf32> to vector<8x1xf32>
    %cst_79 = arith.constant 0.0322580636 : f32
    %170 = vector.broadcast %cst_79 : f32 to vector<8x1xf32>
    %171 = arith.mulf %169, %170 : vector<8x1xf32>
    %172 = math.sqrt %171 : vector<8x1xf32>
    %cst_80 = arith.constant 9.99999997E-7 : f32
    %173 = vector.broadcast %cst_80 : f32 to vector<8x1xf32>
    %174 = arith.addf %172, %173 : vector<8x1xf32>
    %175 = tpu.reciprocal %174 {approx = true} : vector<8x1xf32> -> vector<8x1xf32>
    %176 = vector.broadcast %175 : vector<8x1xf32> to vector<8x32xf32>
    %177 = arith.mulf %166, %176 : vector<8x32xf32>
    %178 = vector.broadcast %159 : vector<1x32xf32> to vector<8x32xf32>
    %179 = arith.mulf %178, %177 : vector<8x32xf32>
    %180 = vector.broadcast %160 : vector<1x32xf32> to vector<8x32xf32>
    %181 = arith.addf %179, %180 : vector<8x32xf32>
    %182 = arith.truncf %181 : vector<8x32xf32> to vector<8x32xbf16>
    %c0_81 = arith.constant 0 : index
    %c0_82 = arith.constant 0 : index
    %183 = vector.load %arg10[%c0_81, %c0_82] : memref<32x96xbf16, #tpu.memory_space<vmem>>, vector<32x96xbf16>
    %cst_83 = arith.constant dense<0.000000e+00> : vector<8x96xf32>
    %184 = tpu.matmul %182, %183, %cst_83 {dimension_numbers = #tpu.dot_dimension_numbers<[1], [0], [0], [1], [0, 0, 1, 1], [], []>} : vector<8x32xbf16>, vector<32x96xbf16>, vector<8x96xf32> -> vector<8x96xf32>
    %c0_84 = arith.constant 0 : index
    %c0_85 = arith.constant 0 : index
    %185 = vector.load %arg11[%c0_84, %c0_85] : memref<1x96xf32, #tpu.memory_space<vmem>>, vector<1x96xf32>
    %186 = vector.broadcast %185 : vector<1x96xf32> to vector<8x96xf32>
    %187 = arith.addf %184, %186 : vector<8x96xf32>
    %188 = tpu.iota {dimensions = array<i32: 0>} : vector<8x8xi32>
    %189 = tpu.iota {dimensions = array<i32: 1>} : vector<8x8xi32>
    %190 = arith.cmpi sle, %189, %188 : vector<8x8xi32>
    %191 = vector.extract_strided_slice %187 {offsets = [0, 0], sizes = [8, 8], strides = [1, 1]} : vector<8x96xf32> to vector<8x8xf32>
    %192 = arith.truncf %191 : vector<8x8xf32> to vector<8x8xbf16>
    %193 = vector.extract_strided_slice %187 {offsets = [0, 32], sizes = [8, 8], strides = [1, 1]} : vector<8x96xf32> to vector<8x8xf32>
    %194 = arith.truncf %193 : vector<8x8xf32> to vector<8x8xbf16>
    %195 = vector.extract_strided_slice %187 {offsets = [0, 64], sizes = [8, 8], strides = [1, 1]} : vector<8x96xf32> to vector<8x8xf32>
    %196 = arith.truncf %195 : vector<8x8xf32> to vector<8x8xbf16>
    %cst_86 = arith.constant dense<0.000000e+00> : vector<8x8xf32>
    %197 = tpu.matmul %192, %194, %cst_86 {dimension_numbers = #tpu.dot_dimension_numbers<[1], [1], [0], [0], [0, 0, 1, 0], [], []>} : vector<8x8xbf16>, vector<8x8xbf16>, vector<8x8xf32> -> vector<8x8xf32>
    %cst_87 = arith.constant 0.353553385 : f32
    %198 = vector.broadcast %cst_87 : f32 to vector<8x8xf32>
    %199 = arith.mulf %197, %198 : vector<8x8xf32>
    %cst_88 = arith.constant -1.000000e+09 : f32
    %200 = vector.broadcast %cst_88 : f32 to vector<8x8xf32>
    %201 = arith.select %190, %199, %200 : vector<8x8xi1>, vector<8x8xf32>
    %cst_89 = arith.constant dense<0xFF800000> : vector<8xf32>
    %202 = vector.multi_reduction <maximumf>, %201, %cst_89 [1] : vector<8x8xf32> to vector<8xf32>
    %203 = vector.shape_cast %202 : vector<8xf32> to vector<8x1xf32>
    %204 = vector.broadcast %203 : vector<8x1xf32> to vector<8x8xf32>
    %205 = arith.subf %201, %204 : vector<8x8xf32>
    %206 = math.exp %205 : vector<8x8xf32>
    %cst_90 = arith.constant dense<0.000000e+00> : vector<8xf32>
    %207 = vector.multi_reduction <add>, %206, %cst_90 [1] : vector<8x8xf32> to vector<8xf32>
    %208 = vector.shape_cast %207 : vector<8xf32> to vector<8x1xf32>
    %209 = tpu.reciprocal %208 {approx = true} : vector<8x1xf32> -> vector<8x1xf32>
    %210 = vector.broadcast %209 : vector<8x1xf32> to vector<8x8xf32>
    %211 = arith.mulf %206, %210 : vector<8x8xf32>
    %212 = arith.truncf %211 : vector<8x8xf32> to vector<8x8xbf16>
    %cst_91 = arith.constant dense<0.000000e+00> : vector<8x8xf32>
    %213 = tpu.matmul %212, %196, %cst_91 {dimension_numbers = #tpu.dot_dimension_numbers<[1], [0], [0], [1], [0, 0, 1, 1], [], []>} : vector<8x8xbf16>, vector<8x8xbf16>, vector<8x8xf32> -> vector<8x8xf32>
    %214 = vector.extract_strided_slice %187 {offsets = [0, 8], sizes = [8, 8], strides = [1, 1]} : vector<8x96xf32> to vector<8x8xf32>
    %215 = arith.truncf %214 : vector<8x8xf32> to vector<8x8xbf16>
    %216 = vector.extract_strided_slice %187 {offsets = [0, 40], sizes = [8, 8], strides = [1, 1]} : vector<8x96xf32> to vector<8x8xf32>
    %217 = arith.truncf %216 : vector<8x8xf32> to vector<8x8xbf16>
    %218 = vector.extract_strided_slice %187 {offsets = [0, 72], sizes = [8, 8], strides = [1, 1]} : vector<8x96xf32> to vector<8x8xf32>
    %219 = arith.truncf %218 : vector<8x8xf32> to vector<8x8xbf16>
    %cst_92 = arith.constant dense<0.000000e+00> : vector<8x8xf32>
    %220 = tpu.matmul %215, %217, %cst_92 {dimension_numbers = #tpu.dot_dimension_numbers<[1], [1], [0], [0], [0, 0, 1, 0], [], []>} : vector<8x8xbf16>, vector<8x8xbf16>, vector<8x8xf32> -> vector<8x8xf32>
    %cst_93 = arith.constant 0.353553385 : f32
    %221 = vector.broadcast %cst_93 : f32 to vector<8x8xf32>
    %222 = arith.mulf %220, %221 : vector<8x8xf32>
    %cst_94 = arith.constant -1.000000e+09 : f32
    %223 = vector.broadcast %cst_94 : f32 to vector<8x8xf32>
    %224 = arith.select %190, %222, %223 : vector<8x8xi1>, vector<8x8xf32>
    %cst_95 = arith.constant dense<0xFF800000> : vector<8xf32>
    %225 = vector.multi_reduction <maximumf>, %224, %cst_95 [1] : vector<8x8xf32> to vector<8xf32>
    %226 = vector.shape_cast %225 : vector<8xf32> to vector<8x1xf32>
    %227 = vector.broadcast %226 : vector<8x1xf32> to vector<8x8xf32>
    %228 = arith.subf %224, %227 : vector<8x8xf32>
    %229 = math.exp %228 : vector<8x8xf32>
    %cst_96 = arith.constant dense<0.000000e+00> : vector<8xf32>
    %230 = vector.multi_reduction <add>, %229, %cst_96 [1] : vector<8x8xf32> to vector<8xf32>
    %231 = vector.shape_cast %230 : vector<8xf32> to vector<8x1xf32>
    %232 = tpu.reciprocal %231 {approx = true} : vector<8x1xf32> -> vector<8x1xf32>
    %233 = vector.broadcast %232 : vector<8x1xf32> to vector<8x8xf32>
    %234 = arith.mulf %229, %233 : vector<8x8xf32>
    %235 = arith.truncf %234 : vector<8x8xf32> to vector<8x8xbf16>
    %cst_97 = arith.constant dense<0.000000e+00> : vector<8x8xf32>
    %236 = tpu.matmul %235, %219, %cst_97 {dimension_numbers = #tpu.dot_dimension_numbers<[1], [0], [0], [1], [0, 0, 1, 1], [], []>} : vector<8x8xbf16>, vector<8x8xbf16>, vector<8x8xf32> -> vector<8x8xf32>
    %237 = vector.extract_strided_slice %187 {offsets = [0, 16], sizes = [8, 8], strides = [1, 1]} : vector<8x96xf32> to vector<8x8xf32>
    %238 = arith.truncf %237 : vector<8x8xf32> to vector<8x8xbf16>
    %239 = vector.extract_strided_slice %187 {offsets = [0, 48], sizes = [8, 8], strides = [1, 1]} : vector<8x96xf32> to vector<8x8xf32>
    %240 = arith.truncf %239 : vector<8x8xf32> to vector<8x8xbf16>
    %241 = vector.extract_strided_slice %187 {offsets = [0, 80], sizes = [8, 8], strides = [1, 1]} : vector<8x96xf32> to vector<8x8xf32>
    %242 = arith.truncf %241 : vector<8x8xf32> to vector<8x8xbf16>
    %cst_98 = arith.constant dense<0.000000e+00> : vector<8x8xf32>
    %243 = tpu.matmul %238, %240, %cst_98 {dimension_numbers = #tpu.dot_dimension_numbers<[1], [1], [0], [0], [0, 0, 1, 0], [], []>} : vector<8x8xbf16>, vector<8x8xbf16>, vector<8x8xf32> -> vector<8x8xf32>
    %cst_99 = arith.constant 0.353553385 : f32
    %244 = vector.broadcast %cst_99 : f32 to vector<8x8xf32>
    %245 = arith.mulf %243, %244 : vector<8x8xf32>
    %cst_100 = arith.constant -1.000000e+09 : f32
    %246 = vector.broadcast %cst_100 : f32 to vector<8x8xf32>
    %247 = arith.select %190, %245, %246 : vector<8x8xi1>, vector<8x8xf32>
    %cst_101 = arith.constant dense<0xFF800000> : vector<8xf32>
    %248 = vector.multi_reduction <maximumf>, %247, %cst_101 [1] : vector<8x8xf32> to vector<8xf32>
    %249 = vector.shape_cast %248 : vector<8xf32> to vector<8x1xf32>
    %250 = vector.broadcast %249 : vector<8x1xf32> to vector<8x8xf32>
    %251 = arith.subf %247, %250 : vector<8x8xf32>
    %252 = math.exp %251 : vector<8x8xf32>
    %cst_102 = arith.constant dense<0.000000e+00> : vector<8xf32>
    %253 = vector.multi_reduction <add>, %252, %cst_102 [1] : vector<8x8xf32> to vector<8xf32>
    %254 = vector.shape_cast %253 : vector<8xf32> to vector<8x1xf32>
    %255 = tpu.reciprocal %254 {approx = true} : vector<8x1xf32> -> vector<8x1xf32>
    %256 = vector.broadcast %255 : vector<8x1xf32> to vector<8x8xf32>
    %257 = arith.mulf %252, %256 : vector<8x8xf32>
    %258 = arith.truncf %257 : vector<8x8xf32> to vector<8x8xbf16>
    %cst_103 = arith.constant dense<0.000000e+00> : vector<8x8xf32>
    %259 = tpu.matmul %258, %242, %cst_103 {dimension_numbers = #tpu.dot_dimension_numbers<[1], [0], [0], [1], [0, 0, 1, 1], [], []>} : vector<8x8xbf16>, vector<8x8xbf16>, vector<8x8xf32> -> vector<8x8xf32>
    %260 = vector.extract_strided_slice %187 {offsets = [0, 24], sizes = [8, 8], strides = [1, 1]} : vector<8x96xf32> to vector<8x8xf32>
    %261 = arith.truncf %260 : vector<8x8xf32> to vector<8x8xbf16>
    %262 = vector.extract_strided_slice %187 {offsets = [0, 56], sizes = [8, 8], strides = [1, 1]} : vector<8x96xf32> to vector<8x8xf32>
    %263 = arith.truncf %262 : vector<8x8xf32> to vector<8x8xbf16>
    %264 = vector.extract_strided_slice %187 {offsets = [0, 88], sizes = [8, 8], strides = [1, 1]} : vector<8x96xf32> to vector<8x8xf32>
    %265 = arith.truncf %264 : vector<8x8xf32> to vector<8x8xbf16>
    %cst_104 = arith.constant dense<0.000000e+00> : vector<8x8xf32>
    %266 = tpu.matmul %261, %263, %cst_104 {dimension_numbers = #tpu.dot_dimension_numbers<[1], [1], [0], [0], [0, 0, 1, 0], [], []>} : vector<8x8xbf16>, vector<8x8xbf16>, vector<8x8xf32> -> vector<8x8xf32>
    %cst_105 = arith.constant 0.353553385 : f32
    %267 = vector.broadcast %cst_105 : f32 to vector<8x8xf32>
    %268 = arith.mulf %266, %267 : vector<8x8xf32>
    %cst_106 = arith.constant -1.000000e+09 : f32
    %269 = vector.broadcast %cst_106 : f32 to vector<8x8xf32>
    %270 = arith.select %190, %268, %269 : vector<8x8xi1>, vector<8x8xf32>
    %cst_107 = arith.constant dense<0xFF800000> : vector<8xf32>
    %271 = vector.multi_reduction <maximumf>, %270, %cst_107 [1] : vector<8x8xf32> to vector<8xf32>
    %272 = vector.shape_cast %271 : vector<8xf32> to vector<8x1xf32>
    %273 = vector.broadcast %272 : vector<8x1xf32> to vector<8x8xf32>
    %274 = arith.subf %270, %273 : vector<8x8xf32>
    %275 = math.exp %274 : vector<8x8xf32>
    %cst_108 = arith.constant dense<0.000000e+00> : vector<8xf32>
    %276 = vector.multi_reduction <add>, %275, %cst_108 [1] : vector<8x8xf32> to vector<8xf32>
    %277 = vector.shape_cast %276 : vector<8xf32> to vector<8x1xf32>
    %278 = tpu.reciprocal %277 {approx = true} : vector<8x1xf32> -> vector<8x1xf32>
    %279 = vector.broadcast %278 : vector<8x1xf32> to vector<8x8xf32>
    %280 = arith.mulf %275, %279 : vector<8x8xf32>
    %281 = arith.truncf %280 : vector<8x8xf32> to vector<8x8xbf16>
    %cst_109 = arith.constant dense<0.000000e+00> : vector<8x8xf32>
    %282 = tpu.matmul %281, %265, %cst_109 {dimension_numbers = #tpu.dot_dimension_numbers<[1], [0], [0], [1], [0, 0, 1, 1], [], []>} : vector<8x8xbf16>, vector<8x8xbf16>, vector<8x8xf32> -> vector<8x8xf32>
    %283 = tpu.concatenate %213, %236, %259, %282 in 1 : vector<8x8xf32>, vector<8x8xf32>, vector<8x8xf32>, vector<8x8xf32> -> vector<8x32xf32>
    %284 = arith.truncf %283 : vector<8x32xf32> to vector<8x32xbf16>
    %c0_110 = arith.constant 0 : index
    %c0_111 = arith.constant 0 : index
    %285 = vector.load %arg12[%c0_110, %c0_111] : memref<32x32xbf16, #tpu.memory_space<vmem>>, vector<32x32xbf16>
    %cst_112 = arith.constant dense<0.000000e+00> : vector<8x32xf32>
    %286 = tpu.matmul %284, %285, %cst_112 {dimension_numbers = #tpu.dot_dimension_numbers<[1], [0], [0], [1], [0, 0, 1, 1], [], []>} : vector<8x32xbf16>, vector<32x32xbf16>, vector<8x32xf32> -> vector<8x32xf32>
    %c0_113 = arith.constant 0 : index
    %c0_114 = arith.constant 0 : index
    %287 = vector.load %arg13[%c0_113, %c0_114] : memref<1x32xf32, #tpu.memory_space<vmem>>, vector<1x32xf32>
    %288 = vector.broadcast %287 : vector<1x32xf32> to vector<8x32xf32>
    %289 = arith.addf %286, %288 : vector<8x32xf32>
    %290 = arith.addf %158, %289 : vector<8x32xf32>
    %c0_115 = arith.constant 0 : index
    %c0_116 = arith.constant 0 : index
    %291 = vector.load %arg14[%c0_115, %c0_116] : memref<1x32xf32, #tpu.memory_space<vmem>>, vector<1x32xf32>
    %c0_117 = arith.constant 0 : index
    %c0_118 = arith.constant 0 : index
    %292 = vector.load %arg15[%c0_117, %c0_118] : memref<1x32xf32, #tpu.memory_space<vmem>>, vector<1x32xf32>
    %cst_119 = arith.constant dense<0.000000e+00> : vector<8xf32>
    %293 = vector.multi_reduction <add>, %290, %cst_119 [1] : vector<8x32xf32> to vector<8xf32>
    %294 = vector.shape_cast %293 : vector<8xf32> to vector<8x1xf32>
    %cst_120 = arith.constant 3.200000e+01 : f32
    %295 = vector.broadcast %cst_120 : f32 to vector<8x1xf32>
    %296 = arith.divf %294, %295 : vector<8x1xf32>
    %297 = vector.broadcast %296 : vector<8x1xf32> to vector<8x32xf32>
    %298 = arith.subf %290, %297 : vector<8x32xf32>
    %299 = arith.mulf %298, %298 : vector<8x32xf32>
    %cst_121 = arith.constant dense<0.000000e+00> : vector<8xf32>
    %300 = vector.multi_reduction <add>, %299, %cst_121 [1] : vector<8x32xf32> to vector<8xf32>
    %301 = vector.shape_cast %300 : vector<8xf32> to vector<8x1xf32>
    %cst_122 = arith.constant 0.0322580636 : f32
    %302 = vector.broadcast %cst_122 : f32 to vector<8x1xf32>
    %303 = arith.mulf %301, %302 : vector<8x1xf32>
    %304 = math.sqrt %303 : vector<8x1xf32>
    %cst_123 = arith.constant 9.99999997E-7 : f32
    %305 = vector.broadcast %cst_123 : f32 to vector<8x1xf32>
    %306 = arith.addf %304, %305 : vector<8x1xf32>
    %307 = tpu.reciprocal %306 {approx = true} : vector<8x1xf32> -> vector<8x1xf32>
    %308 = vector.broadcast %307 : vector<8x1xf32> to vector<8x32xf32>
    %309 = arith.mulf %298, %308 : vector<8x32xf32>
    %310 = vector.broadcast %291 : vector<1x32xf32> to vector<8x32xf32>
    %311 = arith.mulf %310, %309 : vector<8x32xf32>
    %312 = vector.broadcast %292 : vector<1x32xf32> to vector<8x32xf32>
    %313 = arith.addf %311, %312 : vector<8x32xf32>
    %314 = arith.truncf %313 : vector<8x32xf32> to vector<8x32xbf16>
    %c0_124 = arith.constant 0 : index
    %c0_125 = arith.constant 0 : index
    %315 = vector.load %arg16[%c0_124, %c0_125] : memref<32x128xbf16, #tpu.memory_space<vmem>>, vector<32x128xbf16>
    %cst_126 = arith.constant dense<0.000000e+00> : vector<8x128xf32>
    %316 = tpu.matmul %314, %315, %cst_126 {dimension_numbers = #tpu.dot_dimension_numbers<[1], [0], [0], [1], [0, 0, 1, 1], [], []>} : vector<8x32xbf16>, vector<32x128xbf16>, vector<8x128xf32> -> vector<8x128xf32>
    %c0_127 = arith.constant 0 : index
    %c0_128 = arith.constant 0 : index
    %317 = vector.load %arg17[%c0_127, %c0_128] : memref<1x128xf32, #tpu.memory_space<vmem>>, vector<1x128xf32>
    %318 = vector.broadcast %317 : vector<1x128xf32> to vector<8x128xf32>
    %319 = arith.addf %316, %318 : vector<8x128xf32>
    %cst_129 = arith.constant 0.000000e+00 : f32
    %320 = vector.broadcast %cst_129 : f32 to vector<8x128xf32>
    %321 = arith.maximumf %319, %320 : vector<8x128xf32>
    %322 = arith.truncf %321 : vector<8x128xf32> to vector<8x128xbf16>
    %c0_130 = arith.constant 0 : index
    %c0_131 = arith.constant 0 : index
    %323 = vector.load %arg18[%c0_130, %c0_131] : memref<128x32xbf16, #tpu.memory_space<vmem>>, vector<128x32xbf16>
    %cst_132 = arith.constant dense<0.000000e+00> : vector<8x32xf32>
    %324 = tpu.matmul %322, %323, %cst_132 {dimension_numbers = #tpu.dot_dimension_numbers<[1], [0], [0], [1], [0, 0, 1, 1], [], []>} : vector<8x128xbf16>, vector<128x32xbf16>, vector<8x32xf32> -> vector<8x32xf32>
    %c0_133 = arith.constant 0 : index
    %c0_134 = arith.constant 0 : index
    %325 = vector.load %arg19[%c0_133, %c0_134] : memref<1x32xf32, #tpu.memory_space<vmem>>, vector<1x32xf32>
    %326 = vector.broadcast %325 : vector<1x32xf32> to vector<8x32xf32>
    %327 = arith.addf %324, %326 : vector<8x32xf32>
    %328 = arith.addf %290, %327 : vector<8x32xf32>
    %c0_135 = arith.constant 0 : index
    %c0_136 = arith.constant 0 : index
    %c0_137 = arith.constant 0 : index
    %329 = vector.load %arg20[%c0_135, %c0_136, %c0_137] : memref<1x8x32xf32, #tpu.memory_space<vmem>>, vector<1x8x32xf32>
    %330 = vector.shape_cast %329 : vector<1x8x32xf32> to vector<8x32xf32>
    %331 = vector.shape_cast %328 : vector<8x32xf32> to vector<1x8x32xf32>
    tpu.vector_store %arg20[%c0_135, %c0_136, %c0_137], %331 {strides = array<i32>} : memref<1x8x32xf32, #tpu.memory_space<vmem>>, vector<1x8x32xf32>,
    return
  }
  func.func @transform_0(%arg0: i32) -> (i32, i32, i32) {
    %c0_i32 = arith.constant 0 : i32
    %c0_i32_0 = arith.constant 0 : i32
    %c0_i32_1 = arith.constant 0 : i32
    return %arg0, %c0_i32, %c0_i32_0 : i32, i32, i32
  }
  func.func @transform_1(%arg0: i32) -> (i32, i32, i32) {
    %c0_i32 = arith.constant 0 : i32
    %c0_i32_0 = arith.constant 0 : i32
    %c0_i32_1 = arith.constant 0 : i32
    %c0_i32_2 = arith.constant 0 : i32
    return %c0_i32, %c0_i32_0, %c0_i32_1 : i32, i32, i32
  }
  func.func @transform_2(%arg0: i32) -> (i32, i32, i32) {
    %c0_i32 = arith.constant 0 : i32
    %c0_i32_0 = arith.constant 0 : i32
    %c0_i32_1 = arith.constant 0 : i32
    %c0_i32_2 = arith.constant 0 : i32
    return %c0_i32, %c0_i32_0, %c0_i32_1 : i32, i32, i32
  }
  func.func @transform_3(%arg0: i32) -> (i32, i32, i32) {
    %c0_i32 = arith.constant 0 : i32
    %c0_i32_0 = arith.constant 0 : i32
    %c0_i32_1 = arith.constant 0 : i32
    %c0_i32_2 = arith.constant 0 : i32
    return %c0_i32, %c0_i32_0, %c0_i32_1 : i32, i32, i32
  }
  func.func @transform_4(%arg0: i32) -> (i32, i32, i32) {
    %c0_i32 = arith.constant 0 : i32
    %c0_i32_0 = arith.constant 0 : i32
    %c0_i32_1 = arith.constant 0 : i32
    %c0_i32_2 = arith.constant 0 : i32
    return %c0_i32, %c0_i32_0, %c0_i32_1 : i32, i32, i32
  }
  func.func @transform_5(%arg0: i32) -> (i32, i32, i32) {
    %c0_i32 = arith.constant 0 : i32
    %c0_i32_0 = arith.constant 0 : i32
    %c0_i32_1 = arith.constant 0 : i32
    %c0_i32_2 = arith.constant 0 : i32
    return %c0_i32, %c0_i32_0, %c0_i32_1 : i32, i32, i32
  }
  func.func @transform_6(%arg0: i32) -> (i32, i32, i32) {
    %c0_i32 = arith.constant 0 : i32
    %c0_i32_0 = arith.constant 0 : i32
    %c0_i32_1 = arith.constant 0 : i32
    %c0_i32_2 = arith.constant 0 : i32
    return %c0_i32, %c0_i32_0, %c0_i32_1 : i32, i32, i32
  }
  func.func @transform_7(%arg0: i32) -> (i32, i32) {
    %c0_i32 = arith.constant 0 : i32
    %c0_i32_0 = arith.constant 0 : i32
    %c0_i32_1 = arith.constant 0 : i32
    return %c0_i32, %c0_i32_0 : i32, i32
  }
  func.func @transform_8(%arg0: i32) -> (i32, i32) {
    %c0_i32 = arith.constant 0 : i32
    %c0_i32_0 = arith.constant 0 : i32
    %c0_i32_1 = arith.constant 0 : i32
    return %c0_i32, %c0_i32_0 : i32, i32
  }
  func.func @transform_9(%arg0: i32) -> (i32, i32) {
    %c0_i32 = arith.constant 0 : i32
    %c0_i32_0 = arith.constant 0 : i32
    %c0_i32_1 = arith.constant 0 : i32
    return %c0_i32, %c0_i32_0 : i32, i32
  }
  func.func @transform_10(%arg0: i32) -> (i32, i32) {
    %c0_i32 = arith.constant 0 : i32
    %c0_i32_0 = arith.constant 0 : i32
    %c0_i32_1 = arith.constant 0 : i32
    return %c0_i32, %c0_i32_0 : i32, i32
  }
  func.func @transform_11(%arg0: i32) -> (i32, i32) {
    %c0_i32 = arith.constant 0 : i32
    %c0_i32_0 = arith.constant 0 : i32
    %c0_i32_1 = arith.constant 0 : i32
    return %c0_i32, %c0_i32_0 : i32, i32
  }
  func.func @transform_12(%arg0: i32) -> (i32, i32) {
    %c0_i32 = arith.constant 0 : i32
    %c0_i32_0 = arith.constant 0 : i32
    %c0_i32_1 = arith.constant 0 : i32
    return %c0_i32, %c0_i32_0 : i32, i32
  }
  func.func @transform_13(%arg0: i32) -> (i32, i32) {
    %c0_i32 = arith.constant 0 : i32
    %c0_i32_0 = arith.constant 0 : i32
    %c0_i32_1 = arith.constant 0 : i32
    return %c0_i32, %c0_i32_0 : i32, i32
  }
  func.func @transform_14(%arg0: i32) -> (i32, i32) {
    %c0_i32 = arith.constant 0 : i32
    %c0_i32_0 = arith.constant 0 : i32
    %c0_i32_1 = arith.constant 0 : i32
    return %c0_i32, %c0_i32_0 : i32, i32
  }
  func.func @transform_15(%arg0: i32) -> (i32, i32) {
    %c0_i32 = arith.constant 0 : i32
    %c0_i32_0 = arith.constant 0 : i32
    %c0_i32_1 = arith.constant 0 : i32
    return %c0_i32, %c0_i32_0 : i32, i32
  }
  func.func @transform_16(%arg0: i32) -> (i32, i32) {
    %c0_i32 = arith.constant 0 : i32
    %c0_i32_0 = arith.constant 0 : i32
    %c0_i32_1 = arith.constant 0 : i32
    return %c0_i32, %c0_i32_0 : i32, i32
  }
  func.func @transform_17(%arg0: i32) -> (i32, i32) {
    %c0_i32 = arith.constant 0 : i32
    %c0_i32_0 = arith.constant 0 : i32
    %c0_i32_1 = arith.constant 0 : i32
    return %c0_i32, %c0_i32_0 : i32, i32
  }
  func.func @transform_18(%arg0: i32) -> (i32, i32) {
    %c0_i32 = arith.constant 0 : i32
    %c0_i32_0 = arith.constant 0 : i32
    %c0_i32_1 = arith.constant 0 : i32
    return %c0_i32, %c0_i32_0 : i32, i32
  }
  func.func @transform_19(%arg0: i32) -> (i32, i32, i32) {
    %c0_i32 = arith.constant 0 : i32
    %c0_i32_0 = arith.constant 0 : i32
    %c0_i32_1 = arith.constant 0 : i32
    return %arg0, %c0_i32, %c0_i32_0 : i32, i32, i32
  }
}

</mosaic_0001>

<llo_original>
// kernel: block_forward.1
$region0: #{block_forward.1}
  #allocation0 [shape = 'u32[]', space=smem, size = 0x4, offset = 0x4, fixed_abs, tag = 'smem constant byte address 0x4 - core index']
  #allocation1 [shape = 'u32[144,128]{1,0:T(1,128)}', space=vmem, size = 0x12000, scoped, tag = 'internal scratch']
  %s0 = inlined_call_operand.hbm [shape: f32[2,8,32], index: 0, kind: input, shape index: {}, may-alias: {0,19}]
  %s1 = inlined_call_operand.vmem [shape: f32[2,1,32], index: 1, kind: input, shape index: {}]
  %s2 = inlined_call_operand.vmem [shape: f32[2,1,32], index: 2, kind: input, shape index: {}]
  %s3 = inlined_call_operand.vmem [shape: bf16[2,32,32], index: 3, kind: input, shape index: {}]
  %s4 = inlined_call_operand.vmem [shape: bf16[2,32,32], index: 4, kind: input, shape index: {}]
  %s5 = inlined_call_operand.vmem [shape: f32[2,1,32], index: 5, kind: input, shape index: {}]
  %s6 = inlined_call_operand.vmem [shape: f32[2,1,32], index: 6, kind: input, shape index: {}]
  %s7 = inlined_call_operand.hbm [shape: f32[1,32], index: 7, kind: input, shape index: {}]
  %s8 = inlined_call_operand.hbm [shape: f32[1,32], index: 8, kind: input, shape index: {}]
  %s9 = inlined_call_operand.vmem [shape: bf16[32,96], index: 9, kind: input, shape index: {}]
  %s10 = inlined_call_operand.hbm [shape: f32[1,96], index: 10, kind: input, shape index: {}]
  %s11 = inlined_call_operand.vmem [shape: bf16[32,32], index: 11, kind: input, shape index: {}]
  %s12 = inlined_call_operand.hbm [shape: f32[1,32], index: 12, kind: input, shape index: {}]
  %s13 = inlined_call_operand.vmem [shape: f32[1,32], index: 13, kind: input, shape index: {}]
  %s14 = inlined_call_operand.vmem [shape: f32[1,32], index: 14, kind: input, shape index: {}]
  %s15 = inlined_call_operand.vmem [shape: bf16[32,128], index: 15, kind: input, shape index: {}]
  %s16 = inlined_call_operand.hbm [shape: f32[1,128], index: 16, kind: input, shape index: {}]
  %s17 = inlined_call_operand.vmem [shape: bf16[128,32], index: 17, kind: input, shape index: {}]
  %s18 = inlined_call_operand.hbm [shape: f32[1,32], index: 18, kind: input, shape index: {}]
  %s19 = inlined_call_operand.hbm [shape: f32[2,8,32], index: 19, kind: output, shape index: {}, may-alias: {0,19}]
  %s20 = sld [smem:[#allocation0]]
  $region137: #{block_forward.1} parent=0
    _
  %s22 = ssub.s32 1, %s20
  %s23 = scalar_select 0, %s22, %s20
  $region1: #{block_forward.1} parent=0
    #allocation2 [shape = 'u8[8192]{0}', space=vmem, size = 0x2000, scoped, tag = 'input window, operand 0']
    #allocation3 [shape = 's32[2]{0}', space=sflag, size = 0x8, scoped, tag = 'scoped memory for block_forward.1']
    #allocation4 [shape = 's32[2]{0}', space=sflag, size = 0x8, scoped, tag = 'scoped memory for block_forward.1']
    #allocation5 [shape = 'u8[512]{0}', space=vmem, size = 0x400, scoped, tag = 'input window, operand 7, single buffered']
    #allocation6 [shape = 's32[1]{0}', space=sflag, size = 0x4, scoped, tag = 'scoped memory for block_forward.1']
    #allocation7 [shape = 'u8[512]{0}', space=vmem, size = 0x400, scoped, tag = 'input window, operand 8, single buffered']
    #allocation8 [shape = 'u8[512]{0}', space=vmem, size = 0x400, scoped, tag = 'input window, operand 10, single buffered']
    #allocation9 [shape = 's32[1]{0}', space=sflag, size = 0x4, scoped, tag = 'scoped memory for block_forward.1']
    #allocation10 [shape = 'u8[512]{0}', space=vmem, size = 0x400, scoped, tag = 'input window, operand 12, single buffered']
    #allocation11 [shape = 'u8[512]{0}', space=vmem, size = 0x400, scoped, tag = 'input window, operand 16, single buffered']
    #allocation12 [shape = 's32[1]{0}', space=sflag, size = 0x4, scoped, tag = 'scoped memory for block_forward.1']
    #allocation13 [shape = 'u8[512]{0}', space=vmem, size = 0x400, scoped, tag = 'input window, operand 18, single buffered']
    #allocation14 [shape = 'u8[8192]{0}', space=vmem, size = 0x2000, scoped, tag = 'output window, operand 0']
    %24 = vsyncpa [#allocation3], 0
    %s25 = scalar_lea.sflag [#allocation3], 1
    %26 = vsyncpa %s25, 0
    %27 = vsyncpa [#allocation6], 0
    %28 = vsyncpa [#allocation9], 0
    %29 = vsyncpa [#allocation12], 0
    %30 = vsyncpa [#allocation4], 0
    %s31 = scalar_lea.sflag [#allocation4], 1
    %32 = vsyncpa %s31, 0
    loop: start=0, step=1, limit=4
    $region2: #{block_forward.1} parent=1 // loop_pre_header
      _
    $region3: #{block_forward.1} parent=1 // loop_header
      %s34 = sphi 0, %s38
      %p35 = scmp.ge.s32.totalorder %s34, 4
      %s44 = sphi 0, %s46
      %s47 = sphi 0, %s44
      %s48 = sphi 0, %s47
      %s64 = sphi 0, %s48
      %s68 = sphi 0, %s68
      %s70 = sphi 0, %s68
      %s71 = sphi 0, %s70
      %s85 = sphi 0, %s71
      %s89 = sphi 0, %s89
      %s91 = sphi 0, %s89
      %s92 = sphi 0, %s91
      %s106 = sphi 0, %s92
      %s110 = sphi 0, %s110
      %s112 = sphi 0, %s110
      %s113 = sphi 0, %s112
      %s127 = sphi 0, %s113
      %s131 = sphi 0, %s131
      %s133 = sphi 0, %s131
      %s134 = sphi 0, %s133
      %s148 = sphi 0, %s134
      %s152 = sphi 0, %s152
      %s154 = sphi 0, %s152
      %s155 = sphi 0, %s154
      %s169 = sphi 0, %s155
      %s173 = sphi 0, %s173
      %s175 = sphi 0, %s173
      %s176 = sphi 0, %s175
      %s190 = sphi 0, %s176
      %s194 = sphi 0, %s194
      %s196 = sphi 0, %s194
      %s197 = sphi 0, %s196
      %s211 = sphi 0, %s197
      %s215 = sphi 0, %s215
      %s217 = sphi 0, %s215
      %s218 = sphi 0, %s217
      %s232 = sphi 0, %s218
      %s236 = sphi 0, %s236
      %s238 = sphi 0, %s236
      %s239 = sphi 0, %s238
      %s253 = sphi 0, %s239
      %s257 = sphi 0, %s257
      %s259 = sphi 0, %s257
      %s260 = sphi 0, %s259
      %s274 = sphi 0, %s260
      %s278 = sphi 0, %s278
      %s280 = sphi 0, %s278
      %s281 = sphi 0, %s280
      %s295 = sphi 0, %s281
      %s299 = sphi 0, %s299
      %s301 = sphi 0, %s299
      %s302 = sphi 0, %s301
      %s316 = sphi 0, %s302
      %s320 = sphi 0, %s320
      %s322 = sphi 0, %s320
      %s323 = sphi 0, %s322
      %s337 = sphi 0, %s323
      %s341 = sphi 0, %s341
      %s343 = sphi 0, %s341
      %s344 = sphi 0, %s343
      %s358 = sphi 0, %s344
      %s362 = sphi 0, %s362
      %s364 = sphi 0, %s362
      %s365 = sphi 0, %s364
      %s379 = sphi 0, %s365
      %s383 = sphi 0, %s383
      %s385 = sphi 0, %s383
      %s386 = sphi 0, %s385
      %s400 = sphi 0, %s386
      %s404 = sphi 0, %s404
      %s406 = sphi 0, %s404
      %s407 = sphi 0, %s406
      %s421 = sphi 0, %s407
      %s425 = sphi 0, %s425
      %s427 = sphi 0, %s425
      %s428 = sphi 0, %s427
      %s442 = sphi 0, %s428
      %s448 = sphi 0, %s450
      %s451 = sphi 0, %s448
      %s452 = sphi 0, %s451
      %s468 = sphi 0, %s452
    $region4: #{block_forward.1} parent=1 // loop_header_branch
      %37 = sbr.rel (%p35) target = $region8
    $region5: #{block_forward.1} parent=1 // loop_body
      %s39 = ssub.s32 %s34, 1
      %s40 = ssub.s32 %s34, 2
      %s41 = sadd.s32 %s34, 1
      %s42 = ssub.s32 %s34, %s41
      %p43 = scmp.eq.s32.totalorder %s42, 0
      %s45 = sadd.s32 %s44, 1
      %s46 = scalar_select %p43, %s44, %s45
      %p49 = pneg %p43
      %p50 = scmp.eq.s32.totalorder %s34, 1
      %p51 = por %p49, %p50
      %p52 = scmp.ne.s32.totalorder %s44, %s47
      %p53 = scmp.eq.s32.totalorder %s34, 0
      %p54 = por %p52, %p53
      %p55 = scmp.ne.s32.totalorder %s44, %s47
      %p56 = scmp.eq.s32.totalorder %s39, 1
      %p57 = por %p55, %p56
      %p58 = scmp.ne.s32.totalorder %s47, %s48
      %p59 = scmp.eq.s32.totalorder %s39, 0
      %p60 = por %p58, %p59
      %p61 = scmp.ne.s32.totalorder %s47, %s48
      %p62 = scmp.eq.s32.totalorder %s40, 1
      %p63 = por %p61, %p62
      %p65 = scmp.ne.s32.totalorder %s48, %s64
      %p66 = scmp.eq.s32.totalorder %s40, 0
      %p67 = por %p65, %p66
      %s69 = sadd.s32 %s68, 1
      %p72 = scmp.eq.s32.totalorder %s34, 1
      %p73 = scmp.ne.s32.totalorder %s68, %s70
      %p74 = scmp.eq.s32.totalorder %s34, 0
      %p75 = por %p73, %p74
      %p76 = scmp.ne.s32.totalorder %s68, %s70
      %p77 = scmp.eq.s32.totalorder %s39, 1
      %p78 = por %p76, %p77
      %p79 = scmp.ne.s32.totalorder %s70, %s71
      %p80 = scmp.eq.s32.totalorder %s39, 0
      %p81 = por %p79, %p80
      %p82 = scmp.ne.s32.totalorder %s70, %s71
      %p83 = scmp.eq.s32.totalorder %s40, 1
      %p84 = por %p82, %p83
      %p86 = scmp.ne.s32.totalorder %s71, %s85
      %p87 = scmp.eq.s32.totalorder %s40, 0
      %p88 = por %p86, %p87
      %s90 = sadd.s32 %s89, 1
      %p93 = scmp.eq.s32.totalorder %s34, 1
      %p94 = scmp.ne.s32.totalorder %s89, %s91
      %p95 = scmp.eq.s32.totalorder %s34, 0
      %p96 = por %p94, %p95
      %p97 = scmp.ne.s32.totalorder %s89, %s91
      %p98 = scmp.eq.s32.totalorder %s39, 1
      %p99 = por %p97, %p98
      %p100 = scmp.ne.s32.totalorder %s91, %s92
      %p101 = scmp.eq.s32.totalorder %s39, 0
      %p102 = por %p100, %p101
      %p103 = scmp.ne.s32.totalorder %s91, %s92
      %p104 = scmp.eq.s32.totalorder %s40, 1
      %p105 = por %p103, %p104
      %p107 = scmp.ne.s32.totalorder %s92, %s106
      %p108 = scmp.eq.s32.totalorder %s40, 0
      %p109 = por %p107, %p108
      %s111 = sadd.s32 %s110, 1
      %p114 = scmp.eq.s32.totalorder %s34, 1
      %p115 = scmp.ne.s32.totalorder %s110, %s112
      %p116 = scmp.eq.s32.totalorder %s34, 0
      %p117 = por %p115, %p116
      %p118 = scmp.ne.s32.totalorder %s110, %s112
      %p119 = scmp.eq.s32.totalorder %s39, 1
      %p120 = por %p118, %p119
      %p121 = scmp.ne.s32.totalorder %s112, %s113
      %p122 = scmp.eq.s32.totalorder %s39, 0
      %p123 = por %p121, %p122
      %p124 = scmp.ne.s32.totalorder %s112, %s113
      %p125 = scmp.eq.s32.totalorder %s40, 1
      %p126 = por %p124, %p125
      %p128 = scmp.ne.s32.totalorder %s113, %s127
      %p129 = scmp.eq.s32.totalorder %s40, 0
      %p130 = por %p128, %p129
      %s132 = sadd.s32 %s131, 1
      %p135 = scmp.eq.s32.totalorder %s34, 1
      %p136 = scmp.ne.s32.totalorder %s131, %s133
      %p137 = scmp.eq.s32.totalorder %s34, 0
      %p138 = por %p136, %p137
      %p139 = scmp.ne.s32.totalorder %s131, %s133
      %p140 = scmp.eq.s32.totalorder %s39, 1
      %p141 = por %p139, %p140
      %p142 = scmp.ne.s32.totalorder %s133, %s134
      %p143 = scmp.eq.s32.totalorder %s39, 0
      %p144 = por %p142, %p143
      %p145 = scmp.ne.s32.totalorder %s133, %s134
      %p146 = scmp.eq.s32.totalorder %s40, 1
      %p147 = por %p145, %p146
      %p149 = scmp.ne.s32.totalorder %s134, %s148
      %p150 = scmp.eq.s32.totalorder %s40, 0
      %p151 = por %p149, %p150
      %s153 = sadd.s32 %s152, 1
      %p156 = scmp.eq.s32.totalorder %s34, 1
      %p157 = scmp.ne.s32.totalorder %s152, %s154
      %p158 = scmp.eq.s32.totalorder %s34, 0
      %p159 = por %p157, %p158
      %p160 = scmp.ne.s32.totalorder %s152, %s154
      %p161 = scmp.eq.s32.totalorder %s39, 1
      %p162 = por %p160, %p161
      %p163 = scmp.ne.s32.totalorder %s154, %s155
      %p164 = scmp.eq.s32.totalorder %s39, 0
      %p165 = por %p163, %p164
      %p166 = scmp.ne.s32.totalorder %s154, %s155
      %p167 = scmp.eq.s32.totalorder %s40, 1
      %p168 = por %p166, %p167
      %p170 = scmp.ne.s32.totalorder %s155, %s169
      %p171 = scmp.eq.s32.totalorder %s40, 0
      %p172 = por %p170, %p171
      %s174 = sadd.s32 %s173, 1
      %p177 = scmp.eq.s32.totalorder %s34, 1
      %p178 = scmp.ne.s32.totalorder %s173, %s175
      %p179 = scmp.eq.s32.totalorder %s34, 0
      %p180 = por %p178, %p179
      %p181 = scmp.ne.s32.totalorder %s173, %s175
      %p182 = scmp.eq.s32.totalorder %s39, 1
      %p183 = por %p181, %p182
      %p184 = scmp.ne.s32.totalorder %s175, %s176
      %p185 = scmp.eq.s32.totalorder %s39, 0
      %p186 = por %p184, %p185
      %p187 = scmp.ne.s32.totalorder %s175, %s176
      %p188 = scmp.eq.s32.totalorder %s40, 1
      %p189 = por %p187, %p188
      %p191 = scmp.ne.s32.totalorder %s176, %s190
      %p192 = scmp.eq.s32.totalorder %s40, 0
      %p193 = por %p191, %p192
      %s195 = sadd.s32 %s194, 1
      %p198 = scmp.eq.s32.totalorder %s34, 1
      %p199 = scmp.ne.s32.totalorder %s194, %s196
      %p200 = scmp.eq.s32.totalorder %s34, 0
      %p201 = por %p199, %p200
      %p202 = scmp.ne.s32.totalorder %s194, %s196
      %p203 = scmp.eq.s32.totalorder %s39, 1
      %p204 = por %p202, %p203
      %p205 = scmp.ne.s32.totalorder %s196, %s197
      %p206 = scmp.eq.s32.totalorder %s39, 0
      %p207 = por %p205, %p206
      %p208 = scmp.ne.s32.totalorder %s196, %s197
      %p209 = scmp.eq.s32.totalorder %s40, 1
      %p210 = por %p208, %p209
      %p212 = scmp.ne.s32.totalorder %s197, %s211
      %p213 = scmp.eq.s32.totalorder %s40, 0
      %p214 = por %p212, %p213
      %s216 = sadd.s32 %s215, 1
      %p219 = scmp.eq.s32.totalorder %s34, 1
      %p220 = scmp.ne.s32.totalorder %s215, %s217
      %p221 = scmp.eq.s32.totalorder %s34, 0
      %p222 = por %p220, %p221
      %p223 = scmp.ne.s32.totalorder %s215, %s217
      %p224 = scmp.eq.s32.totalorder %s39, 1
      %p225 = por %p223, %p224
      %p226 = scmp.ne.s32.totalorder %s217, %s218
      %p227 = scmp.eq.s32.totalorder %s39, 0
      %p228 = por %p226, %p227
      %p229 = scmp.ne.s32.totalorder %s217, %s218
      %p230 = scmp.eq.s32.totalorder %s40, 1
      %p231 = por %p229, %p230
      %p233 = scmp.ne.s32.totalorder %s218, %s232
      %p234 = scmp.eq.s32.totalorder %s40, 0
      %p235 = por %p233, %p234
      %s237 = sadd.s32 %s236, 1
      %p240 = scmp.eq.s32.totalorder %s34, 1
      %p241 = scmp.ne.s32.totalorder %s236, %s238
      %p242 = scmp.eq.s32.totalorder %s34, 0
      %p243 = por %p241, %p242
      %p244 = scmp.ne.s32.totalorder %s236, %s238
      %p245 = scmp.eq.s32.totalorder %s39, 1
      %p246 = por %p244, %p245
      %p247 = scmp.ne.s32.totalorder %s238, %s239
      %p248 = scmp.eq.s32.totalorder %s39, 0
      %p249 = por %p247, %p248
      %p250 = scmp.ne.s32.totalorder %s238, %s239
      %p251 = scmp.eq.s32.totalorder %s40, 1
      %p252 = por %p250, %p251
      %p254 = scmp.ne.s32.totalorder %s239, %s253
      %p255 = scmp.eq.s32.totalorder %s40, 0
      %p256 = por %p254, %p255
      %s258 = sadd.s32 %s257, 1
      %p261 = scmp.eq.s32.totalorder %s34, 1
      %p262 = scmp.ne.s32.totalorder %s257, %s259
      %p263 = scmp.eq.s32.totalorder %s34, 0
      %p264 = por %p262, %p263
      %p265 = scmp.ne.s32.totalorder %s257, %s259
      %p266 = scmp.eq.s32.totalorder %s39, 1
      %p267 = por %p265, %p266
      %p268 = scmp.ne.s32.totalorder %s259, %s260
      %p269 = scmp.eq.s32.totalorder %s39, 0
      %p270 = por %p268, %p269
      %p271 = scmp.ne.s32.totalorder %s259, %s260
      %p272 = scmp.eq.s32.totalorder %s40, 1
      %p273 = por %p271, %p272
      %p275 = scmp.ne.s32.totalorder %s260, %s274
      %p276 = scmp.eq.s32.totalorder %s40, 0
      %p277 = por %p275, %p276
      %s279 = sadd.s32 %s278, 1
      %p282 = scmp.eq.s32.totalorder %s34, 1
      %p283 = scmp.ne.s32.totalorder %s278, %s280
      %p284 = scmp.eq.s32.totalorder %s34, 0
      %p285 = por %p283, %p284
      %p286 = scmp.ne.s32.totalorder %s278, %s280
      %p287 = scmp.eq.s32.totalorder %s39, 1
      %p288 = por %p286, %p287
      %p289 = scmp.ne.s32.totalorder %s280, %s281
      %p290 = scmp.eq.s32.totalorder %s39, 0
      %p291 = por %p289, %p290
      %p292 = scmp.ne.s32.totalorder %s280, %s281
      %p293 = scmp.eq.s32.totalorder %s40, 1
      %p294 = por %p292, %p293
      %p296 = scmp.ne.s32.totalorder %s281, %s295
      %p297 = scmp.eq.s32.totalorder %s40, 0
      %p298 = por %p296, %p297
      %s300 = sadd.s32 %s299, 1
      %p303 = scmp.eq.s32.totalorder %s34, 1
      %p304 = scmp.ne.s32.totalorder %s299, %s301
      %p305 = scmp.eq.s32.totalorder %s34, 0
      %p306 = por %p304, %p305
      %p307 = scmp.ne.s32.totalorder %s299, %s301
      %p308 = scmp.eq.s32.totalorder %s39, 1
      %p309 = por %p307, %p308
      %p310 = scmp.ne.s32.totalorder %s301, %s302
      %p311 = scmp.eq.s32.totalorder %s39, 0
      %p312 = por %p310, %p311
      %p313 = scmp.ne.s32.totalorder %s301, %s302
      %p314 = scmp.eq.s32.totalorder %s40, 1
      %p315 = por %p313, %p314
      %p317 = scmp.ne.s32.totalorder %s302, %s316
      %p318 = scmp.eq.s32.totalorder %s40, 0
      %p319 = por %p317, %p318
      %s321 = sadd.s32 %s320, 1
      %p324 = scmp.eq.s32.totalorder %s34, 1
      %p325 = scmp.ne.s32.totalorder %s320, %s322
      %p326 = scmp.eq.s32.totalorder %s34, 0
      %p327 = por %p325, %p326
      %p328 = scmp.ne.s32.totalorder %s320, %s322
      %p329 = scmp.eq.s32.totalorder %s39, 1
      %p330 = por %p328, %p329
      %p331 = scmp.ne.s32.totalorder %s322, %s323
      %p332 = scmp.eq.s32.totalorder %s39, 0
      %p333 = por %p331, %p332
      %p334 = scmp.ne.s32.totalorder %s322, %s323
      %p335 = scmp.eq.s32.totalorder %s40, 1
      %p336 = por %p334, %p335
      %p338 = scmp.ne.s32.totalorder %s323, %s337
      %p339 = scmp.eq.s32.totalorder %s40, 0
      %p340 = por %p338, %p339
      %s342 = sadd.s32 %s341, 1
      %p345 = scmp.eq.s32.totalorder %s34, 1
      %p346 = scmp.ne.s32.totalorder %s341, %s343
      %p347 = scmp.eq.s32.totalorder %s34, 0
      %p348 = por %p346, %p347
      %p349 = scmp.ne.s32.totalorder %s341, %s343
      %p350 = scmp.eq.s32.totalorder %s39, 1
      %p351 = por %p349, %p350
      %p352 = scmp.ne.s32.totalorder %s343, %s344
      %p353 = scmp.eq.s32.totalorder %s39, 0
      %p354 = por %p352, %p353
      %p355 = scmp.ne.s32.totalorder %s343, %s344
      %p356 = scmp.eq.s32.totalorder %s40, 1
      %p357 = por %p355, %p356
      %p359 = scmp.ne.s32.totalorder %s344, %s358
      %p360 = scmp.eq.s32.totalorder %s40, 0
      %p361 = por %p359, %p360
      %s363 = sadd.s32 %s362, 1
      %p366 = scmp.eq.s32.totalorder %s34, 1
      %p367 = scmp.ne.s32.totalorder %s362, %s364
      %p368 = scmp.eq.s32.totalorder %s34, 0
      %p369 = por %p367, %p368
      %p370 = scmp.ne.s32.totalorder %s362, %s364
      %p371 = scmp.eq.s32.totalorder %s39, 1
      %p372 = por %p370, %p371
      %p373 = scmp.ne.s32.totalorder %s364, %s365
      %p374 = scmp.eq.s32.totalorder %s39, 0
      %p375 = por %p373, %p374
      %p376 = scmp.ne.s32.totalorder %s364, %s365
      %p377 = scmp.eq.s32.totalorder %s40, 1
      %p378 = por %p376, %p377
      %p380 = scmp.ne.s32.totalorder %s365, %s379
      %p381 = scmp.eq.s32.totalorder %s40, 0
      %p382 = por %p380, %p381
      %s384 = sadd.s32 %s383, 1
      %p387 = scmp.eq.s32.totalorder %s34, 1
      %p388 = scmp.ne.s32.totalorder %s383, %s385
      %p389 = scmp.eq.s32.totalorder %s34, 0
      %p390 = por %p388, %p389
      %p391 = scmp.ne.s32.totalorder %s383, %s385
      %p392 = scmp.eq.s32.totalorder %s39, 1
      %p393 = por %p391, %p392
      %p394 = scmp.ne.s32.totalorder %s385, %s386
      %p395 = scmp.eq.s32.totalorder %s39, 0
      %p396 = por %p394, %p395
      %p397 = scmp.ne.s32.totalorder %s385, %s386
      %p398 = scmp.eq.s32.totalorder %s40, 1
      %p399 = por %p397, %p398
      %p401 = scmp.ne.s32.totalorder %s386, %s400
      %p402 = scmp.eq.s32.totalorder %s40, 0
      %p403 = por %p401, %p402
      %s405 = sadd.s32 %s404, 1
      %p408 = scmp.eq.s32.totalorder %s34, 1
      %p409 = scmp.ne.s32.totalorder %s404, %s406
      %p410 = scmp.eq.s32.totalorder %s34, 0
      %p411 = por %p409, %p410
      %p412 = scmp.ne.s32.totalorder %s404, %s406
      %p413 = scmp.eq.s32.totalorder %s39, 1
      %p414 = por %p412, %p413
      %p415 = scmp.ne.s32.totalorder %s406, %s407
      %p416 = scmp.eq.s32.totalorder %s39, 0
      %p417 = por %p415, %p416
      %p418 = scmp.ne.s32.totalorder %s406, %s407
      %p419 = scmp.eq.s32.totalorder %s40, 1
      %p420 = por %p418, %p419
      %p422 = scmp.ne.s32.totalorder %s407, %s421
      %p423 = scmp.eq.s32.totalorder %s40, 0
      %p424 = por %p422, %p423
      %s426 = sadd.s32 %s425, 1
      %p429 = scmp.eq.s32.totalorder %s34, 1
      %p430 = scmp.ne.s32.totalorder %s425, %s427
      %p431 = scmp.eq.s32.totalorder %s34, 0
      %p432 = por %p430, %p431
      %p433 = scmp.ne.s32.totalorder %s425, %s427
      %p434 = scmp.eq.s32.totalorder %s39, 1
      %p435 = por %p433, %p434
      %p436 = scmp.ne.s32.totalorder %s427, %s428
      %p437 = scmp.eq.s32.totalorder %s39, 0
      %p438 = por %p436, %p437
      %p439 = scmp.ne.s32.totalorder %s427, %s428
      %p440 = scmp.eq.s32.totalorder %s40, 1
      %p441 = por %p439, %p440
      %p443 = scmp.ne.s32.totalorder %s428, %s442
      %p444 = scmp.eq.s32.totalorder %s40, 0
      %p445 = por %p443, %p444
      %s446 = ssub.s32 %s34, %s41
      %p447 = scmp.eq.s32.totalorder %s446, 0
      %s449 = sadd.s32 %s448, 1
      %s450 = scalar_select %p447, %s448, %s449
      %p453 = pneg %p447
      %p454 = scmp.eq.s32.totalorder %s34, 1
      %p455 = por %p453, %p454
      %p456 = scmp.ne.s32.totalorder %s448, %s451
      %p457 = scmp.eq.s32.totalorder %s34, 0
      %p458 = por %p456, %p457
      %p459 = scmp.ne.s32.totalorder %s448, %s451
      %p460 = scmp.eq.s32.totalorder %s39, 1
      %p461 = por %p459, %p460
      %p462 = scmp.ne.s32.totalorder %s451, %s452
      %p463 = scmp.eq.s32.totalorder %s39, 0
      %p464 = por %p462, %p463
      %p465 = scmp.ne.s32.totalorder %s451, %s452
      %p466 = scmp.eq.s32.totalorder %s40, 1
      %p467 = por %p465, %p466
      %p469 = scmp.ne.s32.totalorder %s452, %s468
      %p470 = scmp.eq.s32.totalorder %s40, 0
      %p471 = por %p469, %p470
      %p472 = scmp.le.s32.totalorder 1, %s34
      %p473 = scmp.lt.s32.totalorder %s34, 3
      %p474 = pnand %p472, %p473
      %p475 = pneg %p474
      // Predicated region
      $region9: #{block_forward.1} parent=5 // pred_check
        _
      $region10: #{block_forward.1} parent=5 // pred_check_branch
        %477 = sbr.rel (%p474) target = $region12
      $region11: #{block_forward.1} parent=5 // pred_region
        %s478 = ssub.s32 %s34, 1
        // Predicated region
        $region13: #{block_forward.1} parent=11 // pred_check
          %p479 = pneg %p81
        $region14: #{block_forward.1} parent=11 // pred_check_branch
          %481 = sbr.rel (%p479) target = $region16
        $region15: #{block_forward.1} parent=11 // pred_region
          _
        $region16: #{block_forward.1} parent=11 // pred_fallthru
          _
        // Predicated region
        $region17: #{block_forward.1} parent=11 // pred_check
          %p482 = pneg %p102
        $region18: #{block_forward.1} parent=11 // pred_check_branch
          %484 = sbr.rel (%p482) target = $region20
        $region19: #{block_forward.1} parent=11 // pred_region
          _
        $region20: #{block_forward.1} parent=11 // pred_fallthru
          _
        // Predicated region
        $region21: #{block_forward.1} parent=11 // pred_check
          %p485 = pneg %p123
        $region22: #{block_forward.1} parent=11 // pred_check_branch
          %487 = sbr.rel (%p485) target = $region24
        $region23: #{block_forward.1} parent=11 // pred_region
          _
        $region24: #{block_forward.1} parent=11 // pred_fallthru
          _
        // Predicated region
        $region25: #{block_forward.1} parent=11 // pred_check
          %p488 = pneg %p144
        $region26: #{block_forward.1} parent=11 // pred_check_branch
          %490 = sbr.rel (%p488) target = $region28
        $region27: #{block_forward.1} parent=11 // pred_region
          _
        $region28: #{block_forward.1} parent=11 // pred_fallthru
          _
        // Predicated region
        $region29: #{block_forward.1} parent=11 // pred_check
          %p491 = pneg %p165
        $region30: #{block_forward.1} parent=11 // pred_check_branch
          %493 = sbr.rel (%p491) target = $region32
        $region31: #{block_forward.1} parent=11 // pred_region
          _
        $region32: #{block_forward.1} parent=11 // pred_fallthru
          _
        // Predicated region
        $region33: #{block_forward.1} parent=11 // pred_check
          %p494 = pneg %p186
        $region34: #{block_forward.1} parent=11 // pred_check_branch
          %496 = sbr.rel (%p494) target = $region36
        $region35: #{block_forward.1} parent=11 // pred_region
          _
        $region36: #{block_forward.1} parent=11 // pred_fallthru
          _
        // Predicated region
        $region37: #{block_forward.1} parent=11 // pred_check
          %p497 = pneg %p207
        $region38: #{block_forward.1} parent=11 // pred_check_branch
          %499 = sbr.rel (%p497) target = $region40
        $region39: #{block_forward.1} parent=11 // pred_region
          %s501 = ssub.s32 16, 16
          %502 = vsyncadd [#allocation6], %s501
          %s504 = sshll.u32 [#allocation5], 4
          %s505 = int_to_ptr.vmem [resolvable:$true] %s504
          %507 = dma.hbm_to_vmem [thread:$0]  %s7, 16, %s505, [#allocation6]
        $region40: #{block_forward.1} parent=11 // pred_fallthru
          _
        // Predicated region
        $region41: #{block_forward.1} parent=11 // pred_check
          %p508 = pneg %p228
        $region42: #{block_forward.1} parent=11 // pred_check_branch
          %510 = sbr.rel (%p508) target = $region44
        $region43: #{block_forward.1} parent=11 // pred_region
          %s512 = ssub.s32 16, 16
          %513 = vsyncadd [#allocation6], %s512
          %s515 = sshll.u32 [#allocation7], 4
          %s516 = int_to_ptr.vmem [resolvable:$true] %s515
          %518 = dma.hbm_to_vmem [thread:$0]  %s8, 16, %s516, [#allocation6]
        $region44: #{block_forward.1} parent=11 // pred_fallthru
          _
        // Predicated region
        $region45: #{block_forward.1} parent=11 // pred_check
          %p519 = pneg %p249
        $region46: #{block_forward.1} parent=11 // pred_check_branch
          %521 = sbr.rel (%p519) target = $region48
        $region47: #{block_forward.1} parent=11 // pred_region
          _
        $region48: #{block_forward.1} parent=11 // pred_fallthru
          _
        // Predicated region
        $region49: #{block_forward.1} parent=11 // pred_check
          %p522 = pneg %p270
        $region50: #{block_forward.1} parent=11 // pred_check_branch
          %524 = sbr.rel (%p522) target = $region52
        $region51: #{block_forward.1} parent=11 // pred_region
          %s526 = ssub.s32 16, 16
          %527 = vsyncadd [#allocation9], %s526
          %s529 = sshll.u32 [#allocation8], 4
          %s530 = int_to_ptr.vmem [resolvable:$true] %s529
          %532 = dma.hbm_to_vmem [thread:$0]  %s10, 16, %s530, [#allocation9]
        $region52: #{block_forward.1} parent=11 // pred_fallthru
          _
        // Predicated region
        $region53: #{block_forward.1} parent=11 // pred_check
          %p533 = pneg %p291
        $region54: #{block_forward.1} parent=11 // pred_check_branch
          %535 = sbr.rel (%p533) target = $region56
        $region55: #{block_forward.1} parent=11 // pred_region
          _
        $region56: #{block_forward.1} parent=11 // pred_fallthru
          _
        // Predicated region
        $region57: #{block_forward.1} parent=11 // pred_check
          %p536 = pneg %p312
        $region58: #{block_forward.1} parent=11 // pred_check_branch
          %538 = sbr.rel (%p536) target = $region60
        $region59: #{block_forward.1} parent=11 // pred_region
          %s540 = ssub.s32 16, 16
          %541 = vsyncadd [#allocation9], %s540
          %s543 = sshll.u32 [#allocation10], 4
          %s544 = int_to_ptr.vmem [resolvable:$true] %s543
          %546 = dma.hbm_to_vmem [thread:$0]  %s12, 16, %s544, [#allocation9]
        $region60: #{block_forward.1} parent=11 // pred_fallthru
          _
        // Predicated region
        $region61: #{block_forward.1} parent=11 // pred_check
          %p547 = pneg %p333
        $region62: #{block_forward.1} parent=11 // pred_check_branch
          %549 = sbr.rel (%p547) target = $region64
        $region63: #{block_forward.1} parent=11 // pred_region
          _
        $region64: #{block_forward.1} parent=11 // pred_fallthru
          _
        // Predicated region
        $region65: #{block_forward.1} parent=11 // pred_check
          %p550 = pneg %p354
        $region66: #{block_forward.1} parent=11 // pred_check_branch
          %552 = sbr.rel (%p550) target = $region68
        $region67: #{block_forward.1} parent=11 // pred_region
          _
        $region68: #{block_forward.1} parent=11 // pred_fallthru
          _
        // Predicated region
        $region69: #{block_forward.1} parent=11 // pred_check
          %p553 = pneg %p375
        $region70: #{block_forward.1} parent=11 // pred_check_branch
          %555 = sbr.rel (%p553) target = $region72
        $region71: #{block_forward.1} parent=11 // pred_region
          _
        $region72: #{block_forward.1} parent=11 // pred_fallthru
          _
        // Predicated region
        $region73: #{block_forward.1} parent=11 // pred_check
          %p556 = pneg %p396
        $region74: #{block_forward.1} parent=11 // pred_check_branch
          %558 = sbr.rel (%p556) target = $region76
        $region75: #{block_forward.1} parent=11 // pred_region
          %s560 = ssub.s32 16, 16
          %561 = vsyncadd [#allocation12], %s560
          %s563 = sshll.u32 [#allocation11], 4
          %s564 = int_to_ptr.vmem [resolvable:$true] %s563
          %566 = dma.hbm_to_vmem [thread:$0]  %s16, 16, %s564, [#allocation12]
        $region76: #{block_forward.1} parent=11 // pred_fallthru
          _
        // Predicated region
        $region77: #{block_forward.1} parent=11 // pred_check
          %p567 = pneg %p417
        $region78: #{block_forward.1} parent=11 // pred_check_branch
          %569 = sbr.rel (%p567) target = $region80
        $region79: #{block_forward.1} parent=11 // pred_region
          _
        $region80: #{block_forward.1} parent=11 // pred_fallthru
          _
        // Predicated region
        $region81: #{block_forward.1} parent=11 // pred_check
          %p570 = pneg %p438
        $region82: #{block_forward.1} parent=11 // pred_check_branch
          %572 = sbr.rel (%p570) target = $region84
        $region83: #{block_forward.1} parent=11 // pred_region
          %s574 = ssub.s32 16, 16
          %575 = vsyncadd [#allocation12], %s574
          %s577 = sshll.u32 [#allocation13], 4
          %s578 = int_to_ptr.vmem [resolvable:$true] %s577
          %580 = dma.hbm_to_vmem [thread:$0]  %s18, 16, %s578, [#allocation12]
        $region84: #{block_forward.1} parent=11 // pred_fallthru
          _
      $region12: #{block_forward.1} parent=5 // pred_fallthru
        _
      %p581 = scmp.lt.s32.totalorder %s34, 2
      // Predicated region
      $region85: #{block_forward.1} parent=5 // pred_check
        %p582 = pneg %p581
      $region86: #{block_forward.1} parent=5 // pred_check_branch
        %584 = sbr.rel (%p582) target = $region88
      $region87: #{block_forward.1} parent=5 // pred_region
        // Predicated region
        $region89: #{block_forward.1} parent=87 // pred_check
          %p585 = pneg %p54
        $region90: #{block_forward.1} parent=87 // pred_check_branch
          %587 = sbr.rel (%p585) target = $region92
        $region91: #{block_forward.1} parent=87 // pred_region
          %s588 = sand.u32 %s44, 1
          %s589 = scalar_lea.sflag [#allocation3], %s588
          %s590 = sand.u32 %s44, 1
          %s591 = smul.addr %s590, 8
          %s592 = scalar_lea.vmem [#allocation2], %s591
          %s594 = ssub.s32 128, 128
          %595 = vsyncadd %s589, %s594
          %s596 = smul.addr %s34, 128
          %s597 = scalar_lea.hbm %s0, %s596
          %s599 = sshll.u32 %s592, 4
          %s600 = int_to_ptr.vmem [resolvable:$true] %s599
          %602 = dma.hbm_to_vmem [thread:$0]  %s597, 128, %s600, %s589
        $region92: #{block_forward.1} parent=87 // pred_fallthru
          _
      $region88: #{block_forward.1} parent=5 // pred_fallthru
        _
      %p603 = scmp.le.s32.totalorder 1, %s34
      %p604 = scmp.lt.s32.totalorder %s34, 3
      %p605 = pnand %p603, %p604
      %p606 = pneg %p605
      // Predicated region
      $region93: #{block_forward.1} parent=5 // pred_check
        _
      $region94: #{block_forward.1} parent=5 // pred_check_branch
        %608 = sbr.rel (%p605) target = $region96
      $region95: #{block_forward.1} parent=5 // pred_region
        %s609 = ssub.s32 %s34, 1
        %s610 = sand.u32 %s47, 1
        %s611 = scalar_lea.sflag [#allocation3], %s610
        %s612 = sand.u32 %s47, 1
        %s613 = smul.addr %s612, 8
        %s614 = scalar_lea.vmem [#allocation2], %s613
        // Predicated region
        $region97: #{block_forward.1} parent=95 // pred_check
          %p615 = pneg %p60
        $region98: #{block_forward.1} parent=95 // pred_check_branch
          %617 = sbr.rel (%p615) target = $region100
        $region99: #{block_forward.1} parent=95 // pred_region
          %618 = dma.done %s611, 128
        $region100: #{block_forward.1} parent=95 // pred_fallthru
          _
        // Predicated region
        $region101: #{block_forward.1} parent=95 // pred_check
          %p619 = pneg %p207
        $region102: #{block_forward.1} parent=95 // pred_check_branch
          %621 = sbr.rel (%p619) target = $region104
        $region103: #{block_forward.1} parent=95 // pred_region
          %622 = dma.done [#allocation6], 16
        $region104: #{block_forward.1} parent=95 // pred_fallthru
          _
        // Predicated region
        $region105: #{block_forward.1} parent=95 // pred_check
          %p623 = pneg %p228
        $region106: #{block_forward.1} parent=95 // pred_check_branch
          %625 = sbr.rel (%p623) target = $region108
        $region107: #{block_forward.1} parent=95 // pred_region
          %626 = dma.done [#allocation6], 16
        $region108: #{block_forward.1} parent=95 // pred_fallthru
          _
        // Predicated region
        $region109: #{block_forward.1} parent=95 // pred_check
          %p627 = pneg %p270
        $region110: #{block_forward.1} parent=95 // pred_check_branch
          %629 = sbr.rel (%p627) target = $region112
        $region111: #{block_forward.1} parent=95 // pred_region
          %630 = dma.done [#allocation9], 16
        $region112: #{block_forward.1} parent=95 // pred_fallthru
          _
        // Predicated region
        $region113: #{block_forward.1} parent=95 // pred_check
          %p631 = pneg %p312
        $region114: #{block_forward.1} parent=95 // pred_check_branch
          %633 = sbr.rel (%p631) target = $region116
        $region115: #{block_forward.1} parent=95 // pred_region
          %634 = dma.done [#allocation9], 16
        $region116: #{block_forward.1} parent=95 // pred_fallthru
          _
        // Predicated region
        $region117: #{block_forward.1} parent=95 // pred_check
          %p635 = pneg %p396
        $region118: #{block_forward.1} parent=95 // pred_check_branch
          %637 = sbr.rel (%p635) target = $region120
        $region119: #{block_forward.1} parent=95 // pred_region
          %638 = dma.done [#allocation12], 16
        $region120: #{block_forward.1} parent=95 // pred_fallthru
          _
        // Predicated region
        $region121: #{block_forward.1} parent=95 // pred_check
          %p639 = pneg %p438
        $region122: #{block_forward.1} parent=95 // pred_check_branch
          %641 = sbr.rel (%p639) target = $region124
        $region123: #{block_forward.1} parent=95 // pred_region
          %642 = dma.done [#allocation12], 16
        $region124: #{block_forward.1} parent=95 // pred_fallthru
          _
        %s643 = sand.u32 %s47, 1
        %s644 = scalar_lea.sflag [#allocation3], %s643
        %s645 = sand.u32 %s47, 1
        %s646 = smul.addr %s645, 8
        %s647 = scalar_lea.vmem [#allocation2], %s646
        %p648 = pneg %p60
        %p649 = pneg %p57
        %p650 = pneg %p81
        %p651 = pneg %p78
        %p652 = pneg %p102
        %p653 = pneg %p99
        %p654 = pneg %p123
        %p655 = pneg %p120
        %p656 = pneg %p144
        %p657 = pneg %p141
        %p658 = pneg %p165
        %p659 = pneg %p162
        %p660 = pneg %p186
        %p661 = pneg %p183
        %p662 = pneg %p207
        %p663 = pneg %p204
        %p664 = pneg %p228
        %p665 = pneg %p225
        %p666 = pneg %p249
        %p667 = pneg %p246
        %p668 = pneg %p270
        %p669 = pneg %p267
        %p670 = pneg %p291
        %p671 = pneg %p288
        %p672 = pneg %p312
        %p673 = pneg %p309
        %p674 = pneg %p333
        %p675 = pneg %p330
        %p676 = pneg %p354
        %p677 = pneg %p351
        %p678 = pneg %p375
        %p679 = pneg %p372
        %p680 = pneg %p396
        %p681 = pneg %p393
        %p682 = pneg %p417
        %p683 = pneg %p414
        %p684 = pneg %p438
        %p685 = pneg %p435
        %p686 = pneg %p464
        %p687 = pneg %p461
        %s688 = sand.u32 %s451, 1
        %s689 = scalar_lea.sflag [#allocation4], %s688
        %s690 = sand.u32 %s451, 1
        %s691 = smul.addr %s690, 8
        %s692 = scalar_lea.vmem [#allocation14], %s691
        %v694 = vld [vmem:[%s614] sm:$0xff]
        %v695 = vlaneseq
        %v696 = vshrl.u32 %v695, 7
        %v697 = vld [vmem:[%s1] sm:$0x1]
        %v698 = vld [vmem:[%s2] sm:$0x1]
        %vm699 = vcmask 261120
        %v700 = vsel %vm699, %v694, 0.0
        %701 = vadd.xlane.f32.xlu0 %v700
        %v702 = vpop.xlane.xlu0 %701
        %v703 = vrcp.pop 32.0
        %v704 = vmul.f32 %v702, %v703
        %v705 = vsub.f32 %v694, %v704
        %v706 = vmul.f32 %v705, %v705
        %v707 = vsel %vm699, %v706, 0.0
        %708 = vadd.xlane.f32.xlu0 %v707
        %v709 = vpop.xlane.xlu0 %708
        %v710 = vmul.f32 %v709, 0.032258064
        %v711 = vrsqrt.pop %v710
        %v712 = vmul.f32 %v710, %v711
        %vm713 = vcmp.eq.f32.partialorder %v710, inf
        %v714 = vsel %vm713, %v710, %v712
        %vm715 = vcmp.eq.f32.partialorder %v710, 0.0
        %v716 = vand.u32 %v710, 2147483648
        %v717 = vsel %vm715, %v716, %v714
        %v718 = vadd.f32 %v717, 1e-06
        %v719 = vrcp.pop %v718
        %v720 = vmul.f32 %v705, %v719
        %v722 = vlaneseq
        %v723 = vshrl.u32 %v722, 7
        %v724 = vsub.s32 0, %v723
        %v725 = vrot.slane %v697, %v724
        %v727 = vmul.f32 %v725, %v720
        %v729 = vlaneseq
        %v730 = vshrl.u32 %v729, 7
        %v731 = vsub.s32 0, %v730
        %v732 = vrot.slane %v698, %v731
        %v734 = vadd.f32 %v727, %v732
        %v735 = vpack.c.bf16 %v734, %v734
        %v736 = vld [vmem:[%s4] sm:$0xf]
        %v737 = vld [vmem:[%s4 + $0x4] sm:$0xf]
        %v738 = vld [vmem:[%s4 + $0x8] sm:$0xf]
        %v739 = vld [vmem:[%s4 + $0xc] sm:$0xf]
        %v744 = vunpack.c.l.b16 %v736
        %v745 = vunpack.c.l.b16 %v737
        %v746 = vunpack.c.l.b16 %v738
        %v747 = vunpack.c.l.b16 %v739
        %v748 = vpack.c.b16 %v745, %v744
        %v749 = vpack.c.b16 %v747, %v746
        %v753 = vsel %vm699, %v735, 0
        %755 = vmatprep.subr.bf16.mxu0 0
        %756 = vmatpush1.bf16.msra.mxu0 %v748
        %757 = vmatprep.subr.bf16.mxu0 0
        %758 = vmatpush1.bf16.msra.mxu0 %v749
        %759 = vmatprep.subr.bf16.mxu0 0
        %760 = vmatpush1.bf16.msra.mxu0 0
        %761 = vmatprep.subr.bf16.mxu0 0
        %762 = vmatpush1.bf16.msra.mxu0 0
        %763 = vmatprep.subr.bf16.mxu0 0
        %764 = vmatpush1.bf16.msra.mxu0 0
        %765 = vmatprep.subr.bf16.mxu0 0
        %766 = vmatpush1.bf16.msra.mxu0 0
        %767 = vmatprep.subr.bf16.mxu0 0
        %768 = vmatpush1.bf16.msra.mxu0 0
        %769 = vmatprep.subr.bf16.mxu0 0
        %770 = vmatpush1.bf16.msra.mxu0 0
        %771 = vmatprep.subr.bf16.mxu0 0
        %772 = vmatpush1.bf16.msra.mxu0 0
        %773 = vmatprep.subr.bf16.mxu0 0
        %774 = vmatpush1.bf16.msra.mxu0 0
        %775 = vmatprep.subr.bf16.mxu0 0
        %776 = vmatpush1.bf16.msra.mxu0 0
        %777 = vmatprep.subr.bf16.mxu0 0
        %778 = vmatpush1.bf16.msra.mxu0 0
        %779 = vmatprep.subr.bf16.mxu0 0
        %780 = vmatpush1.bf16.msra.mxu0 0
        %781 = vmatprep.subr.bf16.mxu0 0
        %782 = vmatpush1.bf16.msra.mxu0 0
        %783 = vmatprep.subr.bf16.mxu0 0
        %784 = vmatpush1.bf16.msra.mxu0 0
        %785 = vmatprep.subr.bf16.mxu0 0
        %786 = vmatpush1.bf16.msra.mxu0 0
        %787 = vmatprep.mubr.bf16.mxu0 0
        %788 = vmatmul.mubr.bf16.gmra.mrb[0].mxu0 %v753
        %v789 = vpop.f32.mrb[0].mxu0
        %v790 = vadd.f32 0.0, %v789
        %v791 = vpop.f32.mrb[0].mxu0
        %v792 = vpop.f32.mrb[0].mxu0
        %v793 = vpop.f32.mrb[0].mxu0
        %794 = vdwg.mxu0
        %v795 = vld [vmem:[%s3] sm:$0xf]
        %v796 = vld [vmem:[%s3 + $0x4] sm:$0xf]
        %v797 = vld [vmem:[%s3 + $0x8] sm:$0xf]
        %v798 = vld [vmem:[%s3 + $0xc] sm:$0xf]
        %v799 = vld [vmem:[%s5] sm:$0x1]
        %v800 = vld [vmem:[%s6] sm:$0x1]
        %vm801 = vcmp.ge.s32.totalorder %v696, 2
        %v802 = vrot.slane %v790, 6
        %v803 = vsel %vm801, %v802, 0.0
        %v805 = vlaneseq
        %v806 = vshrl.u32 %v805, 7
        %v807 = vsub.s32 0, %v806
        %v808 = vrot.slane %v799, %v807
        %v810 = vadd.f32 %v803, %v808
        %v811 = vmax.f32 %v810, 0.0
        %v813 = vlaneseq
        %v814 = vshrl.u32 %v813, 7
        %v815 = vsub.s32 0, %v814
        %v816 = vrot.slane %v800, %v815
        %v818 = vmul.f32 %v816, %v811
        %vm819 = vcmp.ge.s32.totalorder %v696, 1
        %v820 = vrot.slane %v790, 7
        %v821 = vsel %vm819, %v820, 0.0
        %v822 = vpack.c.bf16 %v818, %v818
        %v827 = vunpack.c.l.b16 %v795
        %v828 = vunpack.c.l.b16 %v796
        %v829 = vunpack.c.l.b16 %v797
        %v830 = vunpack.c.l.b16 %v798
        %v831 = vpack.c.b16 %v828, %v827
        %v832 = vpack.c.b16 %v830, %v829
        %v836 = vsel %vm699, %v822, 0
        %838 = vmatprep.subr.bf16.mxu0 0
        %839 = vmatpush1.bf16.msra.mxu0 %v831
        %840 = vmatprep.subr.bf16.mxu0 0
        %841 = vmatpush1.bf16.msra.mxu0 %v832
        %842 = vmatprep.subr.bf16.mxu0 0
        %843 = vmatpush1.bf16.msra.mxu0 0
        %844 = vmatprep.subr.bf16.mxu0 0
        %845 = vmatpush1.bf16.msra.mxu0 0
        %846 = vmatprep.subr.bf16.mxu0 0
        %847 = vmatpush1.bf16.msra.mxu0 0
        %848 = vmatprep.subr.bf16.mxu0 0
        %849 = vmatpush1.bf16.msra.mxu0 0
        %850 = vmatprep.subr.bf16.mxu0 0
        %851 = vmatpush1.bf16.msra.mxu0 0
        %852 = vmatprep.subr.bf16.mxu0 0
        %853 = vmatpush1.bf16.msra.mxu0 0
        %854 = vmatprep.subr.bf16.mxu0 0
        %855 = vmatpush1.bf16.msra.mxu0 0
        %856 = vmatprep.subr.bf16.mxu0 0
        %857 = vmatpush1.bf16.msra.mxu0 0
        %858 = vmatprep.subr.bf16.mxu0 0
        %859 = vmatpush1.bf16.msra.mxu0 0
        %860 = vmatprep.subr.bf16.mxu0 0
        %861 = vmatpush1.bf16.msra.mxu0 0
        %862 = vmatprep.subr.bf16.mxu0 0
        %863 = vmatpush1.bf16.msra.mxu0 0
        %864 = vmatprep.subr.bf16.mxu0 0
        %865 = vmatpush1.bf16.msra.mxu0 0
        %866 = vmatprep.subr.bf16.mxu0 0
        %867 = vmatpush1.bf16.msra.mxu0 0
        %868 = vmatprep.subr.bf16.mxu0 0
        %869 = vmatpush1.bf16.msra.mxu0 0
        %870 = vmatprep.mubr.bf16.mxu0 0
        %871 = vmatmul.mubr.bf16.gmra.mrb[0].mxu0 %v836
        %v872 = vpop.f32.mrb[0].mxu0
        %v873 = vadd.f32 %v821, %v872
        %v874 = vpop.f32.mrb[0].mxu0
        %v875 = vpop.f32.mrb[0].mxu0
        %v876 = vpop.f32.mrb[0].mxu0
        %877 = vdwg.mxu0
        %v878 = vadd.f32 %v873, %v808
        %v879 = vsub.f32 0.0, %v818
        %v880 = vmax.f32 %v878, 0.0
        %v881 = vadd.f32 %v879, %v880
        %v882 = vmul.f32 %v816, %v881
        %v883 = vadd.f32 %v818, %v882
        %v884 = vpack.c.bf16 %v883, %v883
        %v886 = vsel %vm699, %v884, 0
        %888 = vmatprep.subr.bf16.mxu0 0
        %889 = vmatpush1.bf16.msra.mxu0 %v831
        %890 = vmatprep.subr.bf16.mxu0 0
        %891 = vmatpush1.bf16.msra.mxu0 %v832
        %892 = vmatprep.subr.bf16.mxu0 0
        %893 = vmatpush1.bf16.msra.mxu0 0
        %894 = vmatprep.subr.bf16.mxu0 0
        %895 = vmatpush1.bf16.msra.mxu0 0
        %896 = vmatprep.subr.bf16.mxu0 0
        %897 = vmatpush1.bf16.msra.mxu0 0
        %898 = vmatprep.subr.bf16.mxu0 0
        %899 = vmatpush1.bf16.msra.mxu0 0
        %900 = vmatprep.subr.bf16.mxu0 0
        %901 = vmatpush1.bf16.msra.mxu0 0
        %902 = vmatprep.subr.bf16.mxu0 0
        %903 = vmatpush1.bf16.msra.mxu0 0
        %904 = vmatprep.subr.bf16.mxu0 0
        %905 = vmatpush1.bf16.msra.mxu0 0
        %906 = vmatprep.subr.bf16.mxu0 0
        %907 = vmatpush1.bf16.msra.mxu0 0
        %908 = vmatprep.subr.bf16.mxu0 0
        %909 = vmatpush1.bf16.msra.mxu0 0
        %910 = vmatprep.subr.bf16.mxu0 0
        %911 = vmatpush1.bf16.msra.mxu0 0
        %912 = vmatprep.subr.bf16.mxu0 0
        %913 = vmatpush1.bf16.msra.mxu0 0
        %914 = vmatprep.subr.bf16.mxu0 0
        %915 = vmatpush1.bf16.msra.mxu0 0
        %916 = vmatprep.subr.bf16.mxu0 0
        %917 = vmatpush1.bf16.msra.mxu0 0
        %918 = vmatprep.subr.bf16.mxu0 0
        %919 = vmatpush1.bf16.msra.mxu0 0
        %920 = vmatprep.mubr.bf16.mxu0 0
        %921 = vmatmul.mubr.bf16.gmra.mrb[0].mxu0 %v886
        %v922 = vpop.f32.mrb[0].mxu0
        %v923 = vadd.f32 %v790, %v922
        %v924 = vpop.f32.mrb[0].mxu0
        %v925 = vpop.f32.mrb[0].mxu0
        %v926 = vpop.f32.mrb[0].mxu0
        %927 = vdwg.mxu0
        %v928 = vadd.f32 %v923, %v808
        %v929 = vsub.f32 0.0, %v883
        %v930 = vmax.f32 %v928, 0.0
        %v931 = vadd.f32 %v929, %v930
        %v932 = vmul.f32 %v816, %v931
        %v933 = vadd.f32 %v883, %v932
        %v934 = vadd.f32 %v694, %v933
        %s935 = scalar_lea.vmem %s1, 1
        %v936 = vld [vmem:[%s935] sm:$0x1]
        %s937 = scalar_lea.vmem %s2, 1
        %v938 = vld [vmem:[%s937] sm:$0x1]
        %v939 = vsel %vm699, %v934, 0.0
        %940 = vadd.xlane.f32.xlu0 %v939
        %v941 = vpop.xlane.xlu0 %940
        %v942 = vmul.f32 %v941, %v703
        %v943 = vsub.f32 %v934, %v942
        %v944 = vmul.f32 %v943, %v943
        %v945 = vsel %vm699, %v944, 0.0
        %946 = vadd.xlane.f32.xlu0 %v945
        %v947 = vpop.xlane.xlu0 %946
        %v948 = vmul.f32 %v947, 0.032258064
        %v949 = vrsqrt.pop %v948
        %v950 = vmul.f32 %v948, %v949
        %vm951 = vcmp.eq.f32.partialorder %v948, inf
        %v952 = vsel %vm951, %v948, %v950
        %vm953 = vcmp.eq.f32.partialorder %v948, 0.0
        %v954 = vand.u32 %v948, 2147483648
        %v955 = vsel %vm953, %v954, %v952
        %v956 = vadd.f32 %v955, 1e-06
        %v957 = vrcp.pop %v956
        %v958 = vmul.f32 %v943, %v957
        %v960 = vlaneseq
        %v961 = vshrl.u32 %v960, 7
        %v962 = vsub.s32 0, %v961
        %v963 = vrot.slane %v936, %v962
        %v965 = vmul.f32 %v963, %v958
        %v967 = vlaneseq
        %v968 = vshrl.u32 %v967, 7
        %v969 = vsub.s32 0, %v968
        %v970 = vrot.slane %v938, %v969
        %v972 = vadd.f32 %v965, %v970
        %v973 = vpack.c.bf16 %v972, %v972
        %s974 = scalar_lea.vmem %s4, 16
        %v975 = vld [vmem:[%s974] sm:$0xf]
        %v976 = vld [vmem:[%s974 + $0x4] sm:$0xf]
        %v977 = vld [vmem:[%s974 + $0x8] sm:$0xf]
        %v978 = vld [vmem:[%s974 + $0xc] sm:$0xf]
        %v983 = vunpack.c.l.b16 %v975
        %v984 = vunpack.c.l.b16 %v976
        %v985 = vunpack.c.l.b16 %v977
        %v986 = vunpack.c.l.b16 %v978
        %v987 = vpack.c.b16 %v984, %v983
        %v988 = vpack.c.b16 %v986, %v985
        %v992 = vsel %vm699, %v973, 0
        %994 = vmatprep.subr.bf16.mxu0 0
        %995 = vmatpush1.bf16.msra.mxu0 %v987
        %996 = vmatprep.subr.bf16.mxu0 0
        %997 = vmatpush1.bf16.msra.mxu0 %v988
        %998 = vmatprep.subr.bf16.mxu0 0
        %999 = vmatpush1.bf16.msra.mxu0 0
        %1000 = vmatprep.subr.bf16.mxu0 0
        %1001 = vmatpush1.bf16.msra.mxu0 0
        %1002 = vmatprep.subr.bf16.mxu0 0
        %1003 = vmatpush1.bf16.msra.mxu0 0
        %1004 = vmatprep.subr.bf16.mxu0 0
        %1005 = vmatpush1.bf16.msra.mxu0 0
        %1006 = vmatprep.subr.bf16.mxu0 0
        %1007 = vmatpush1.bf16.msra.mxu0 0
        %1008 = vmatprep.subr.bf16.mxu0 0
        %1009 = vmatpush1.bf16.msra.mxu0 0
        %1010 = vmatprep.subr.bf16.mxu0 0
        %1011 = vmatpush1.bf16.msra.mxu0 0
        %1012 = vmatprep.subr.bf16.mxu0 0
        %1013 = vmatpush1.bf16.msra.mxu0 0
        %1014 = vmatprep.subr.bf16.mxu0 0
        %1015 = vmatpush1.bf16.msra.mxu0 0
        %1016 = vmatprep.subr.bf16.mxu0 0
        %1017 = vmatpush1.bf16.msra.mxu0 0
        %1018 = vmatprep.subr.bf16.mxu0 0
        %1019 = vmatpush1.bf16.msra.mxu0 0
        %1020 = vmatprep.subr.bf16.mxu0 0
        %1021 = vmatpush1.bf16.msra.mxu0 0
        %1022 = vmatprep.subr.bf16.mxu0 0
        %1023 = vmatpush1.bf16.msra.mxu0 0
        %1024 = vmatprep.subr.bf16.mxu0 0
        %1025 = vmatpush1.bf16.msra.mxu0 0
        %1026 = vmatprep.mubr.bf16.mxu0 0
        %1027 = vmatmul.mubr.bf16.gmra.mrb[0].mxu0 %v992
        %v1028 = vpop.f32.mrb[0].mxu0
        %v1029 = vadd.f32 0.0, %v1028
        %v1030 = vpop.f32.mrb[0].mxu0
        %v1031 = vpop.f32.mrb[0].mxu0
        %v1032 = vpop.f32.mrb[0].mxu0
        %1033 = vdwg.mxu0
        %s1034 = scalar_lea.vmem %s3, 16
        %v1035 = vld [vmem:[%s1034] sm:$0xf]
        %v1036 = vld [vmem:[%s1034 + $0x4] sm:$0xf]
        %v1037 = vld [vmem:[%s1034 + $0x8] sm:$0xf]
        %v1038 = vld [vmem:[%s1034 + $0xc] sm:$0xf]
        %s1039 = scalar_lea.vmem %s5, 1
        %v1040 = vld [vmem:[%s1039] sm:$0x1]
        %s1041 = scalar_lea.vmem %s6, 1
        %v1042 = vld [vmem:[%s1041] sm:$0x1]
        %v1043 = vrot.slane %v1029, 6
        %v1044 = vsel %vm801, %v1043, 0.0
        %v1046 = vlaneseq
        %v1047 = vshrl.u32 %v1046, 7
        %v1048 = vsub.s32 0, %v1047
        %v1049 = vrot.slane %v1040, %v1048
        %v1051 = vadd.f32 %v1044, %v1049
        %v1052 = vmax.f32 %v1051, 0.0
        %v1054 = vlaneseq
        %v1055 = vshrl.u32 %v1054, 7
        %v1056 = vsub.s32 0, %v1055
        %v1057 = vrot.slane %v1042, %v1056
        %v1059 = vmul.f32 %v1057, %v1052
        %v1060 = vrot.slane %v1029, 7
        %v1061 = vsel %vm819, %v1060, 0.0
        %v1062 = vpack.c.bf16 %v1059, %v1059
        %v1067 = vunpack.c.l.b16 %v1035
        %v1068 = vunpack.c.l.b16 %v1036
        %v1069 = vunpack.c.l.b16 %v1037
        %v1070 = vunpack.c.l.b16 %v1038
        %v1071 = vpack.c.b16 %v1068, %v1067
        %v1072 = vpack.c.b16 %v1070, %v1069
        %v1076 = vsel %vm699, %v1062, 0
        %1078 = vmatprep.subr.bf16.mxu0 0
        %1079 = vmatpush1.bf16.msra.mxu0 %v1071
        %1080 = vmatprep.subr.bf16.mxu0 0
        %1081 = vmatpush1.bf16.msra.mxu0 %v1072
        %1082 = vmatprep.subr.bf16.mxu0 0
        %1083 = vmatpush1.bf16.msra.mxu0 0
        %1084 = vmatprep.subr.bf16.mxu0 0
        %1085 = vmatpush1.bf16.msra.mxu0 0
        %1086 = vmatprep.subr.bf16.mxu0 0
        %1087 = vmatpush1.bf16.msra.mxu0 0
        %1088 = vmatprep.subr.bf16.mxu0 0
        %1089 = vmatpush1.bf16.msra.mxu0 0
        %1090 = vmatprep.subr.bf16.mxu0 0
        %1091 = vmatpush1.bf16.msra.mxu0 0
        %1092 = vmatprep.subr.bf16.mxu0 0
        %1093 = vmatpush1.bf16.msra.mxu0 0
        %1094 = vmatprep.subr.bf16.mxu0 0
        %1095 = vmatpush1.bf16.msra.mxu0 0
        %1096 = vmatprep.subr.bf16.mxu0 0
        %1097 = vmatpush1.bf16.msra.mxu0 0
        %1098 = vmatprep.subr.bf16.mxu0 0
        %1099 = vmatpush1.bf16.msra.mxu0 0
        %1100 = vmatprep.subr.bf16.mxu0 0
        %1101 = vmatpush1.bf16.msra.mxu0 0
        %1102 = vmatprep.subr.bf16.mxu0 0
        %1103 = vmatpush1.bf16.msra.mxu0 0
        %1104 = vmatprep.subr.bf16.mxu0 0
        %1105 = vmatpush1.bf16.msra.mxu0 0
        %1106 = vmatprep.subr.bf16.mxu0 0
        %1107 = vmatpush1.bf16.msra.mxu0 0
        %1108 = vmatprep.subr.bf16.mxu0 0
        %1109 = vmatpush1.bf16.msra.mxu0 0
        %1110 = vmatprep.mubr.bf16.mxu0 0
        %1111 = vmatmul.mubr.bf16.gmra.mrb[0].mxu0 %v1076
        %v1112 = vpop.f32.mrb[0].mxu0
        %v1113 = vadd.f32 %v1061, %v1112
        %v1114 = vpop.f32.mrb[0].mxu0
        %v1115 = vpop.f32.mrb[0].mxu0
        %v1116 = vpop.f32.mrb[0].mxu0
        %1117 = vdwg.mxu0
        %v1118 = vadd.f32 %v1113, %v1049
        %v1119 = vsub.f32 0.0, %v1059
        %v1120 = vmax.f32 %v1118, 0.0
        %v1121 = vadd.f32 %v1119, %v1120
        %v1122 = vmul.f32 %v1057, %v1121
        %v1123 = vadd.f32 %v1059, %v1122
        %v1124 = vpack.c.bf16 %v1123, %v1123
        %v1126 = vsel %vm699, %v1124, 0
        %1128 = vmatprep.subr.bf16.mxu0 0
        %1129 = vmatpush1.bf16.msra.mxu0 %v1071
        %1130 = vmatprep.subr.bf16.mxu0 0
        %1131 = vmatpush1.bf16.msra.mxu0 %v1072
        %1132 = vmatprep.subr.bf16.mxu0 0
        %1133 = vmatpush1.bf16.msra.mxu0 0
        %1134 = vmatprep.subr.bf16.mxu0 0
        %1135 = vmatpush1.bf16.msra.mxu0 0
        %1136 = vmatprep.subr.bf16.mxu0 0
        %1137 = vmatpush1.bf16.msra.mxu0 0
        %1138 = vmatprep.subr.bf16.mxu0 0
        %1139 = vmatpush1.bf16.msra.mxu0 0
        %1140 = vmatprep.subr.bf16.mxu0 0
        %1141 = vmatpush1.bf16.msra.mxu0 0
        %1142 = vmatprep.subr.bf16.mxu0 0
        %1143 = vmatpush1.bf16.msra.mxu0 0
        %1144 = vmatprep.subr.bf16.mxu0 0
        %1145 = vmatpush1.bf16.msra.mxu0 0
        %1146 = vmatprep.subr.bf16.mxu0 0
        %1147 = vmatpush1.bf16.msra.mxu0 0
        %1148 = vmatprep.subr.bf16.mxu0 0
        %1149 = vmatpush1.bf16.msra.mxu0 0
        %1150 = vmatprep.subr.bf16.mxu0 0
        %1151 = vmatpush1.bf16.msra.mxu0 0
        %1152 = vmatprep.subr.bf16.mxu0 0
        %1153 = vmatpush1.bf16.msra.mxu0 0
        %1154 = vmatprep.subr.bf16.mxu0 0
        %1155 = vmatpush1.bf16.msra.mxu0 0
        %1156 = vmatprep.subr.bf16.mxu0 0
        %1157 = vmatpush1.bf16.msra.mxu0 0
        %1158 = vmatprep.subr.bf16.mxu0 0
        %1159 = vmatpush1.bf16.msra.mxu0 0
        %1160 = vmatprep.mubr.bf16.mxu0 0
        %1161 = vmatmul.mubr.bf16.gmra.mrb[0].mxu0 %v1126
        %v1162 = vpop.f32.mrb[0].mxu0
        %v1163 = vadd.f32 %v1029, %v1162
        %v1164 = vpop.f32.mrb[0].mxu0
        %v1165 = vpop.f32.mrb[0].mxu0
        %v1166 = vpop.f32.mrb[0].mxu0
        %1167 = vdwg.mxu0
        %v1168 = vadd.f32 %v1163, %v1049
        %v1169 = vsub.f32 0.0, %v1123
        %v1170 = vmax.f32 %v1168, 0.0
        %v1171 = vadd.f32 %v1169, %v1170
        %v1172 = vmul.f32 %v1057, %v1171
        %v1173 = vadd.f32 %v1123, %v1172
        %v1174 = vadd.f32 %v934, %v1173
        %v1175 = vld [vmem:[#allocation5] sm:$0x1]
        %v1176 = vld [vmem:[#allocation7] sm:$0x1]
        %v1177 = vsel %vm699, %v1174, 0.0
        %1178 = vadd.xlane.f32.xlu0 %v1177
        %v1179 = vpop.xlane.xlu0 %1178
        %v1180 = vmul.f32 %v1179, %v703
        %v1181 = vsub.f32 %v1174, %v1180
        %v1182 = vmul.f32 %v1181, %v1181
        %v1183 = vsel %vm699, %v1182, 0.0
        %1184 = vadd.xlane.f32.xlu0 %v1183
        %v1185 = vpop.xlane.xlu0 %1184
        %v1186 = vmul.f32 %v1185, 0.032258064
        %v1187 = vrsqrt.pop %v1186
        %v1188 = vmul.f32 %v1186, %v1187
        %vm1189 = vcmp.eq.f32.partialorder %v1186, inf
        %v1190 = vsel %vm1189, %v1186, %v1188
        %vm1191 = vcmp.eq.f32.partialorder %v1186, 0.0
        %v1192 = vand.u32 %v1186, 2147483648
        %v1193 = vsel %vm1191, %v1192, %v1190
        %v1194 = vadd.f32 %v1193, 1e-06
        %v1195 = vrcp.pop %v1194
        %v1196 = vmul.f32 %v1181, %v1195
        %v1198 = vlaneseq
        %v1199 = vshrl.u32 %v1198, 7
        %v1200 = vsub.s32 0, %v1199
        %v1201 = vrot.slane %v1175, %v1200
        %v1203 = vmul.f32 %v1201, %v1196
        %v1205 = vlaneseq
        %v1206 = vshrl.u32 %v1205, 7
        %v1207 = vsub.s32 0, %v1206
        %v1208 = vrot.slane %v1176, %v1207
        %v1210 = vadd.f32 %v1203, %v1208
        %v1211 = vpack.c.bf16 %v1210, %v1210
        %v1212 = vld [vmem:[%s9] sm:$0xf]
        %v1213 = vld [vmem:[%s9 + $0x4] sm:$0xf]
        %v1214 = vld [vmem:[%s9 + $0x8] sm:$0xf]
        %v1215 = vld [vmem:[%s9 + $0xc] sm:$0xf]
        %v1216 = vld [vmem:[#allocation8] sm:$0x1]
        %v1218 = vlaneseq
        %v1219 = vshrl.u32 %v1218, 7
        %v1220 = vsub.s32 0, %v1219
        %v1221 = vrot.slane %v1216, %v1220
        %v1227 = vunpack.c.l.b16 %v1212
        %v1228 = vunpack.c.l.b16 %v1213
        %v1229 = vunpack.c.l.b16 %v1214
        %v1230 = vunpack.c.l.b16 %v1215
        %v1231 = vpack.c.b16 %v1228, %v1227
        %v1232 = vpack.c.b16 %v1230, %v1229
        %v1236 = vsel %vm699, %v1211, 0
        %1238 = vmatprep.subr.bf16.mxu0 0
        %1239 = vmatpush1.bf16.msra.mxu0 %v1231
        %1240 = vmatprep.subr.bf16.mxu0 0
        %1241 = vmatpush1.bf16.msra.mxu0 %v1232
        %1242 = vmatprep.subr.bf16.mxu0 0
        %1243 = vmatpush1.bf16.msra.mxu0 0
        %1244 = vmatprep.subr.bf16.mxu0 0
        %1245 = vmatpush1.bf16.msra.mxu0 0
        %1246 = vmatprep.subr.bf16.mxu0 0
        %1247 = vmatpush1.bf16.msra.mxu0 0
        %1248 = vmatprep.subr.bf16.mxu0 0
        %1249 = vmatpush1.bf16.msra.mxu0 0
        %1250 = vmatprep.subr.bf16.mxu0 0
        %1251 = vmatpush1.bf16.msra.mxu0 0
        %1252 = vmatprep.subr.bf16.mxu0 0
        %1253 = vmatpush1.bf16.msra.mxu0 0
        %1254 = vmatprep.subr.bf16.mxu0 0
        %1255 = vmatpush1.bf16.msra.mxu0 0
        %1256 = vmatprep.subr.bf16.mxu0 0
        %1257 = vmatpush1.bf16.msra.mxu0 0
        %1258 = vmatprep.subr.bf16.mxu0 0
        %1259 = vmatpush1.bf16.msra.mxu0 0
        %1260 = vmatprep.subr.bf16.mxu0 0
        %1261 = vmatpush1.bf16.msra.mxu0 0
        %1262 = vmatprep.subr.bf16.mxu0 0
        %1263 = vmatpush1.bf16.msra.mxu0 0
        %1264 = vmatprep.subr.bf16.mxu0 0
        %1265 = vmatpush1.bf16.msra.mxu0 0
        %1266 = vmatprep.subr.bf16.mxu0 0
        %1267 = vmatpush1.bf16.msra.mxu0 0
        %1268 = vmatprep.subr.bf16.mxu0 0
        %1269 = vmatpush1.bf16.msra.mxu0 0
        %1270 = vmatprep.mubr.bf16.mxu0 0
        %1271 = vmatmul.mubr.bf16.gmra.mrb[0].mxu0 %v1236
        %v1272 = vpop.f32.mrb[0].mxu0
        %v1273 = vadd.f32 %v1221, %v1272
        %v1274 = vpop.f32.mrb[0].mxu0
        %v1275 = vpop.f32.mrb[0].mxu0
        %v1276 = vpop.f32.mrb[0].mxu0
        %1277 = vdwg.mxu0
        %v1278 = vlaneseq
        %v1279 = vand.u32 %v1278, 127
        %vm1280 = vcmp.le.s32.totalorder %v1279, %v696
        %v1281 = vpack.c.bf16 %v1273, %v1273
        %1283 = vrot.lane.b32.xlu0 %v1281, 96
        %v1284 = vpop.permute.xlu0 %1283
        %vm1285 = vcmask 64512
        %v1287 = vsel %vm1285, %v1281, 0
        %v1290 = vsel %vm1285, %v1284, 0
        %1292 = vmatprep.subr.bf16.mxu0 0
        %1293 = vmatpush1.bf16.xpose.msra.mxu0 %v1290
        %1294 = vmatprep.subr.bf16.mxu0 0
        %1295 = vmatpush1.bf16.xpose.msra.mxu0 0
        %1296 = vmatprep.subr.bf16.mxu0 0
        %1297 = vmatpush1.bf16.xpose.msra.mxu0 0
        %1298 = vmatprep.subr.bf16.mxu0 0
        %1299 = vmatpush1.bf16.xpose.msra.mxu0 0
        %1300 = vmatprep.subr.bf16.mxu0 0
        %1301 = vmatpush1.bf16.xpose.msra.mxu0 0
        %1302 = vmatprep.subr.bf16.mxu0 0
        %1303 = vmatpush1.bf16.xpose.msra.mxu0 0
        %1304 = vmatprep.subr.bf16.mxu0 0
        %1305 = vmatpush1.bf16.xpose.msra.mxu0 0
        %1306 = vmatprep.subr.bf16.mxu0 0
        %1307 = vmatpush1.bf16.xpose.msra.mxu0 0
        %1308 = vmatprep.subr.bf16.mxu0 0
        %1309 = vmatpush1.bf16.xpose.msra.mxu0 0
        %1310 = vmatprep.subr.bf16.mxu0 0
        %1311 = vmatpush1.bf16.xpose.msra.mxu0 0
        %1312 = vmatprep.subr.bf16.mxu0 0
        %1313 = vmatpush1.bf16.xpose.msra.mxu0 0
        %1314 = vmatprep.subr.bf16.mxu0 0
        %1315 = vmatpush1.bf16.xpose.msra.mxu0 0
        %1316 = vmatprep.subr.bf16.mxu0 0
        %1317 = vmatpush1.bf16.xpose.msra.mxu0 0
        %1318 = vmatprep.subr.bf16.mxu0 0
        %1319 = vmatpush1.bf16.xpose.msra.mxu0 0
        %1320 = vmatprep.subr.bf16.mxu0 0
        %1321 = vmatpush1.bf16.xpose.msra.mxu0 0
        %1322 = vmatprep.subr.bf16.mxu0 0
        %1323 = vmatpush1.bf16.xpose.msra.mxu0 0
        %1324 = vmatprep.mubr.bf16.mxu0 0
        %1325 = vmatmul.mubr.bf16.gmra.mrb[0].mxu0 %v1287
        %v1326 = vpop.f32.mrb[0].mxu0
        %v1327 = vadd.f32 0.0, %v1326
        %v1328 = vpop.f32.mrb[0].mxu0
        %v1329 = vpop.f32.mrb[0].mxu0
        %v1330 = vpop.f32.mrb[0].mxu0
        %1331 = vdwg.mxu0
        %v1332 = vmul.f32 %v1327, 0.35355338
        %v1333 = vsel %vm1280, %v1332, -1e+09
        %v1334 = vsel %vm1285, %v1333, -inf
        %1335 = vmax.xlane.f32.xlu0 %v1334
        %v1336 = vpop.xlane.xlu0 %1335
        %v1337 = vsub.f32 %v1333, %v1336
        %v1338 = vmul.f32 %v1337, 1.442695
        %v1339 = vpow.pop %v1338
        %v1340 = vsel %vm1285, %v1339, 0.0
        %1341 = vadd.xlane.f32.xlu0 %v1340
        %v1342 = vpop.xlane.xlu0 %1341
        %v1343 = vrcp.pop %v1342
        %v1344 = vmul.f32 %v1339, %v1343
        %v1345 = vpack.c.bf16 %v1344, %v1344
        %1346 = vrot.lane.b32.xlu0 %v1281, 64
        %v1347 = vpop.permute.xlu0 %1346
        %v1349 = vsel %vm1285, %v1345, 0
        %vm1351 = vcmask 1043456
        %v1353 = vsel %vm1351, %v1347, 0
        %1355 = vmatprep.subr.bf16.mxu0 0
        %1356 = vmatpush1.bf16.msra.mxu0 %v1353
        %1357 = vmatprep.subr.bf16.mxu0 0
        %1358 = vmatpush1.bf16.msra.mxu0 0
        %1359 = vmatprep.subr.bf16.mxu0 0
        %1360 = vmatpush1.bf16.msra.mxu0 0
        %1361 = vmatprep.subr.bf16.mxu0 0
        %1362 = vmatpush1.bf16.msra.mxu0 0
        %1363 = vmatprep.subr.bf16.mxu0 0
        %1364 = vmatpush1.bf16.msra.mxu0 0
        %1365 = vmatprep.subr.bf16.mxu0 0
        %1366 = vmatpush1.bf16.msra.mxu0 0
        %1367 = vmatprep.subr.bf16.mxu0 0
        %1368 = vmatpush1.bf16.msra.mxu0 0
        %1369 = vmatprep.subr.bf16.mxu0 0
        %1370 = vmatpush1.bf16.msra.mxu0 0
        %1371 = vmatprep.subr.bf16.mxu0 0
        %1372 = vmatpush1.bf16.msra.mxu0 0
        %1373 = vmatprep.subr.bf16.mxu0 0
        %1374 = vmatpush1.bf16.msra.mxu0 0
        %1375 = vmatprep.subr.bf16.mxu0 0
        %1376 = vmatpush1.bf16.msra.mxu0 0
        %1377 = vmatprep.subr.bf16.mxu0 0
        %1378 = vmatpush1.bf16.msra.mxu0 0
        %1379 = vmatprep.subr.bf16.mxu0 0
        %1380 = vmatpush1.bf16.msra.mxu0 0
        %1381 = vmatprep.subr.bf16.mxu0 0
        %1382 = vmatpush1.bf16.msra.mxu0 0
        %1383 = vmatprep.subr.bf16.mxu0 0
        %1384 = vmatpush1.bf16.msra.mxu0 0
        %1385 = vmatprep.subr.bf16.mxu0 0
        %1386 = vmatpush1.bf16.msra.mxu0 0
        %1387 = vmatprep.mubr.bf16.mxu0 0
        %1388 = vmatmul.mubr.bf16.gmra.mrb[0].mxu0 %v1349
        %v1389 = vpop.f32.mrb[0].mxu0
        %v1390 = vadd.f32 0.0, %v1389
        %v1391 = vpop.f32.mrb[0].mxu0
        %v1392 = vpop.f32.mrb[0].mxu0
        %v1393 = vpop.f32.mrb[0].mxu0
        %1394 = vdwg.mxu0
        %1395 = vrot.lane.b32.xlu0 %v1281, 120
        %v1396 = vpop.permute.xlu0 %1395
        %1397 = vrot.lane.b32.xlu0 %v1281, 88
        %v1398 = vpop.permute.xlu0 %1397
        %v1400 = vsel %vm1285, %v1396, 0
        %v1403 = vsel %vm1285, %v1398, 0
        %1405 = vmatprep.subr.bf16.mxu0 0
        %1406 = vmatpush1.bf16.xpose.msra.mxu0 %v1403
        %1407 = vmatprep.subr.bf16.mxu0 0
        %1408 = vmatpush1.bf16.xpose.msra.mxu0 0
        %1409 = vmatprep.subr.bf16.mxu0 0
        %1410 = vmatpush1.bf16.xpose.msra.mxu0 0
        %1411 = vmatprep.subr.bf16.mxu0 0
        %1412 = vmatpush1.bf16.xpose.msra.mxu0 0
        %1413 = vmatprep.subr.bf16.mxu0 0
        %1414 = vmatpush1.bf16.xpose.msra.mxu0 0
        %1415 = vmatprep.subr.bf16.mxu0 0
        %1416 = vmatpush1.bf16.xpose.msra.mxu0 0
        %1417 = vmatprep.subr.bf16.mxu0 0
        %1418 = vmatpush1.bf16.xpose.msra.mxu0 0
        %1419 = vmatprep.subr.bf16.mxu0 0
        %1420 = vmatpush1.bf16.xpose.msra.mxu0 0
        %1421 = vmatprep.subr.bf16.mxu0 0
        %1422 = vmatpush1.bf16.xpose.msra.mxu0 0
        %1423 = vmatprep.subr.bf16.mxu0 0
        %1424 = vmatpush1.bf16.xpose.msra.mxu0 0
        %1425 = vmatprep.subr.bf16.mxu0 0
        %1426 = vmatpush1.bf16.xpose.msra.mxu0 0
        %1427 = vmatprep.subr.bf16.mxu0 0
        %1428 = vmatpush1.bf16.xpose.msra.mxu0 0
        %1429 = vmatprep.subr.bf16.mxu0 0
        %1430 = vmatpush1.bf16.xpose.msra.mxu0 0
        %1431 = vmatprep.subr.bf16.mxu0 0
        %1432 = vmatpush1.bf16.xpose.msra.mxu0 0
        %1433 = vmatprep.subr.bf16.mxu0 0
        %1434 = vmatpush1.bf16.xpose.msra.mxu0 0
        %1435 = vmatprep.subr.bf16.mxu0 0
        %1436 = vmatpush1.bf16.xpose.msra.mxu0 0
        %1437 = vmatprep.mubr.bf16.mxu0 0
        %1438 = vmatmul.mubr.bf16.gmra.mrb[0].mxu0 %v1400
        %v1439 = vpop.f32.mrb[0].mxu0
        %v1440 = vadd.f32 0.0, %v1439
        %v1441 = vpop.f32.mrb[0].mxu0
        %v1442 = vpop.f32.mrb[0].mxu0
        %v1443 = vpop.f32.mrb[0].mxu0
        %1444 = vdwg.mxu0
        %v1445 = vmul.f32 %v1440, 0.35355338
        %v1446 = vsel %vm1280, %v1445, -1e+09
        %v1447 = vsel %vm1285, %v1446, -inf
        %1448 = vmax.xlane.f32.xlu0 %v1447
        %v1449 = vpop.xlane.xlu0 %1448
        %v1450 = vsub.f32 %v1446, %v1449
        %v1451 = vmul.f32 %v1450, 1.442695
        %v1452 = vpow.pop %v1451
        %v1453 = vsel %vm1285, %v1452, 0.0
        %1454 = vadd.xlane.f32.xlu0 %v1453
        %v1455 = vpop.xlane.xlu0 %1454
        %v1456 = vrcp.pop %v1455
        %v1457 = vmul.f32 %v1452, %v1456
        %v1458 = vpack.c.bf16 %v1457, %v1457
        %1459 = vrot.lane.b32.xlu0 %v1281, 56
        %v1460 = vpop.permute.xlu0 %1459
        %v1462 = vsel %vm1285, %v1458, 0
        %v1465 = vsel %vm1351, %v1460, 0
        %1467 = vmatprep.subr.bf16.mxu0 0
        %1468 = vmatpush1.bf16.msra.mxu0 %v1465
        %1469 = vmatprep.subr.bf16.mxu0 0
        %1470 = vmatpush1.bf16.msra.mxu0 0
        %1471 = vmatprep.subr.bf16.mxu0 0
        %1472 = vmatpush1.bf16.msra.mxu0 0
        %1473 = vmatprep.subr.bf16.mxu0 0
        %1474 = vmatpush1.bf16.msra.mxu0 0
        %1475 = vmatprep.subr.bf16.mxu0 0
        %1476 = vmatpush1.bf16.msra.mxu0 0
        %1477 = vmatprep.subr.bf16.mxu0 0
        %1478 = vmatpush1.bf16.msra.mxu0 0
        %1479 = vmatprep.subr.bf16.mxu0 0
        %1480 = vmatpush1.bf16.msra.mxu0 0
        %1481 = vmatprep.subr.bf16.mxu0 0
        %1482 = vmatpush1.bf16.msra.mxu0 0
        %1483 = vmatprep.subr.bf16.mxu0 0
        %1484 = vmatpush1.bf16.msra.mxu0 0
        %1485 = vmatprep.subr.bf16.mxu0 0
        %1486 = vmatpush1.bf16.msra.mxu0 0
        %1487 = vmatprep.subr.bf16.mxu0 0
        %1488 = vmatpush1.bf16.msra.mxu0 0
        %1489 = vmatprep.subr.bf16.mxu0 0
        %1490 = vmatpush1.bf16.msra.mxu0 0
        %1491 = vmatprep.subr.bf16.mxu0 0
        %1492 = vmatpush1.bf16.msra.mxu0 0
        %1493 = vmatprep.subr.bf16.mxu0 0
        %1494 = vmatpush1.bf16.msra.mxu0 0
        %1495 = vmatprep.subr.bf16.mxu0 0
        %1496 = vmatpush1.bf16.msra.mxu0 0
        %1497 = vmatprep.subr.bf16.mxu0 0
        %1498 = vmatpush1.bf16.msra.mxu0 0
        %1499 = vmatprep.mubr.bf16.mxu0 0
        %1500 = vmatmul.mubr.bf16.gmra.mrb[0].mxu0 %v1462
        %v1501 = vpop.f32.mrb[0].mxu0
        %v1502 = vadd.f32 0.0, %v1501
        %v1503 = vpop.f32.mrb[0].mxu0
        %v1504 = vpop.f32.mrb[0].mxu0
        %v1505 = vpop.f32.mrb[0].mxu0
        %1506 = vdwg.mxu0
        %1507 = vrot.lane.b32.xlu0 %v1281, 112
        %v1508 = vpop.permute.xlu0 %1507
        %1509 = vrot.lane.b32.xlu0 %v1281, 80
        %v1510 = vpop.permute.xlu0 %1509
        %v1512 = vsel %vm1285, %v1508, 0
        %v1515 = vsel %vm1285, %v1510, 0
        %1517 = vmatprep.subr.bf16.mxu0 0
        %1518 = vmatpush1.bf16.xpose.msra.mxu0 %v1515
        %1519 = vmatprep.subr.bf16.mxu0 0
        %1520 = vmatpush1.bf16.xpose.msra.mxu0 0
        %1521 = vmatprep.subr.bf16.mxu0 0
        %1522 = vmatpush1.bf16.xpose.msra.mxu0 0
        %1523 = vmatprep.subr.bf16.mxu0 0
        %1524 = vmatpush1.bf16.xpose.msra.mxu0 0
        %1525 = vmatprep.subr.bf16.mxu0 0
        %1526 = vmatpush1.bf16.xpose.msra.mxu0 0
        %1527 = vmatprep.subr.bf16.mxu0 0
        %1528 = vmatpush1.bf16.xpose.msra.mxu0 0
        %1529 = vmatprep.subr.bf16.mxu0 0
        %1530 = vmatpush1.bf16.xpose.msra.mxu0 0
        %1531 = vmatprep.subr.bf16.mxu0 0
        %1532 = vmatpush1.bf16.xpose.msra.mxu0 0
        %1533 = vmatprep.subr.bf16.mxu0 0
        %1534 = vmatpush1.bf16.xpose.msra.mxu0 0
        %1535 = vmatprep.subr.bf16.mxu0 0
        %1536 = vmatpush1.bf16.xpose.msra.mxu0 0
        %1537 = vmatprep.subr.bf16.mxu0 0
        %1538 = vmatpush1.bf16.xpose.msra.mxu0 0
        %1539 = vmatprep.subr.bf16.mxu0 0
        %1540 = vmatpush1.bf16.xpose.msra.mxu0 0
        %1541 = vmatprep.subr.bf16.mxu0 0
        %1542 = vmatpush1.bf16.xpose.msra.mxu0 0
        %1543 = vmatprep.subr.bf16.mxu0 0
        %1544 = vmatpush1.bf16.xpose.msra.mxu0 0
        %1545 = vmatprep.subr.bf16.mxu0 0
        %1546 = vmatpush1.bf16.xpose.msra.mxu0 0
        %1547 = vmatprep.subr.bf16.mxu0 0
        %1548 = vmatpush1.bf16.xpose.msra.mxu0 0
        %1549 = vmatprep.mubr.bf16.mxu0 0
        %1550 = vmatmul.mubr.bf16.gmra.mrb[0].mxu0 %v1512
        %v1551 = vpop.f32.mrb[0].mxu0
        %v1552 = vadd.f32 0.0, %v1551
        %v1553 = vpop.f32.mrb[0].mxu0
        %v1554 = vpop.f32.mrb[0].mxu0
        %v1555 = vpop.f32.mrb[0].mxu0
        %1556 = vdwg.mxu0
        %v1557 = vmul.f32 %v1552, 0.35355338
        %v1558 = vsel %vm1280, %v1557, -1e+09
        %v1559 = vsel %vm1285, %v1558, -inf
        %1560 = vmax.xlane.f32.xlu0 %v1559
        %v1561 = vpop.xlane.xlu0 %1560
        %v1562 = vsub.f32 %v1558, %v1561
        %v1563 = vmul.f32 %v1562, 1.442695
        %v1564 = vpow.pop %v1563
        %v1565 = vsel %vm1285, %v1564, 0.0
        %1566 = vadd.xlane.f32.xlu0 %v1565
        %v1567 = vpop.xlane.xlu0 %1566
        %v1568 = vrcp.pop %v1567
        %v1569 = vmul.f32 %v1564, %v1568
        %v1570 = vpack.c.bf16 %v1569, %v1569
        %1571 = vrot.lane.b32.xlu0 %v1281, 48
        %v1572 = vpop.permute.xlu0 %1571
        %v1574 = vsel %vm1285, %v1570, 0
        %v1577 = vsel %vm1351, %v1572, 0
        %1579 = vmatprep.subr.bf16.mxu0 0
        %1580 = vmatpush1.bf16.msra.mxu0 %v1577
        %1581 = vmatprep.subr.bf16.mxu0 0
        %1582 = vmatpush1.bf16.msra.mxu0 0
        %1583 = vmatprep.subr.bf16.mxu0 0
        %1584 = vmatpush1.bf16.msra.mxu0 0
        %1585 = vmatprep.subr.bf16.mxu0 0
        %1586 = vmatpush1.bf16.msra.mxu0 0
        %1587 = vmatprep.subr.bf16.mxu0 0
        %1588 = vmatpush1.bf16.msra.mxu0 0
        %1589 = vmatprep.subr.bf16.mxu0 0
        %1590 = vmatpush1.bf16.msra.mxu0 0
        %1591 = vmatprep.subr.bf16.mxu0 0
        %1592 = vmatpush1.bf16.msra.mxu0 0
        %1593 = vmatprep.subr.bf16.mxu0 0
        %1594 = vmatpush1.bf16.msra.mxu0 0
        %1595 = vmatprep.subr.bf16.mxu0 0
        %1596 = vmatpush1.bf16.msra.mxu0 0
        %1597 = vmatprep.subr.bf16.mxu0 0
        %1598 = vmatpush1.bf16.msra.mxu0 0
        %1599 = vmatprep.subr.bf16.mxu0 0
        %1600 = vmatpush1.bf16.msra.mxu0 0
        %1601 = vmatprep.subr.bf16.mxu0 0
        %1602 = vmatpush1.bf16.msra.mxu0 0
        %1603 = vmatprep.subr.bf16.mxu0 0
        %1604 = vmatpush1.bf16.msra.mxu0 0
        %1605 = vmatprep.subr.bf16.mxu0 0
        %1606 = vmatpush1.bf16.msra.mxu0 0
        %1607 = vmatprep.subr.bf16.mxu0 0
        %1608 = vmatpush1.bf16.msra.mxu0 0
        %1609 = vmatprep.subr.bf16.mxu0 0
        %1610 = vmatpush1.bf16.msra.mxu0 0
        %1611 = vmatprep.mubr.bf16.mxu0 0
        %1612 = vmatmul.mubr.bf16.gmra.mrb[0].mxu0 %v1574
        %v1613 = vpop.f32.mrb[0].mxu0
        %v1614 = vadd.f32 0.0, %v1613
        %v1615 = vpop.f32.mrb[0].mxu0
        %v1616 = vpop.f32.mrb[0].mxu0
        %v1617 = vpop.f32.mrb[0].mxu0
        %1618 = vdwg.mxu0
        %1619 = vrot.lane.b32.xlu0 %v1281, 104
        %v1620 = vpop.permute.xlu0 %1619
        %1621 = vrot.lane.b32.xlu0 %v1281, 72
        %v1622 = vpop.permute.xlu0 %1621
        %v1624 = vsel %vm1285, %v1620, 0
        %v1627 = vsel %vm1285, %v1622, 0
        %1629 = vmatprep.subr.bf16.mxu0 0
        %1630 = vmatpush1.bf16.xpose.msra.mxu0 %v1627
        %1631 = vmatprep.subr.bf16.mxu0 0
        %1632 = vmatpush1.bf16.xpose.msra.mxu0 0
        %1633 = vmatprep.subr.bf16.mxu0 0
        %1634 = vmatpush1.bf16.xpose.msra.mxu0 0
        %1635 = vmatprep.subr.bf16.mxu0 0
        %1636 = vmatpush1.bf16.xpose.msra.mxu0 0
        %1637 = vmatprep.subr.bf16.mxu0 0
        %1638 = vmatpush1.bf16.xpose.msra.mxu0 0
        %1639 = vmatprep.subr.bf16.mxu0 0
        %1640 = vmatpush1.bf16.xpose.msra.mxu0 0
        %1641 = vmatprep.subr.bf16.mxu0 0
        %1642 = vmatpush1.bf16.xpose.msra.mxu0 0
        %1643 = vmatprep.subr.bf16.mxu0 0
        %1644 = vmatpush1.bf16.xpose.msra.mxu0 0
        %1645 = vmatprep.subr.bf16.mxu0 0
        %1646 = vmatpush1.bf16.xpose.msra.mxu0 0
        %1647 = vmatprep.subr.bf16.mxu0 0
        %1648 = vmatpush1.bf16.xpose.msra.mxu0 0
        %1649 = vmatprep.subr.bf16.mxu0 0
        %1650 = vmatpush1.bf16.xpose.msra.mxu0 0
        %1651 = vmatprep.subr.bf16.mxu0 0
        %1652 = vmatpush1.bf16.xpose.msra.mxu0 0
        %1653 = vmatprep.subr.bf16.mxu0 0
        %1654 = vmatpush1.bf16.xpose.msra.mxu0 0
        %1655 = vmatprep.subr.bf16.mxu0 0
        %1656 = vmatpush1.bf16.xpose.msra.mxu0 0
        %1657 = vmatprep.subr.bf16.mxu0 0
        %1658 = vmatpush1.bf16.xpose.msra.mxu0 0
        %1659 = vmatprep.subr.bf16.mxu0 0
        %1660 = vmatpush1.bf16.xpose.msra.mxu0 0
        %1661 = vmatprep.mubr.bf16.mxu0 0
        %1662 = vmatmul.mubr.bf16.gmra.mrb[0].mxu0 %v1624
        %v1663 = vpop.f32.mrb[0].mxu0
        %v1664 = vadd.f32 0.0, %v1663
        %v1665 = vpop.f32.mrb[0].mxu0
        %v1666 = vpop.f32.mrb[0].mxu0
        %v1667 = vpop.f32.mrb[0].mxu0
        %1668 = vdwg.mxu0
        %v1669 = vmul.f32 %v1664, 0.35355338
        %v1670 = vsel %vm1280, %v1669, -1e+09
        %v1671 = vsel %vm1285, %v1670, -inf
        %1672 = vmax.xlane.f32.xlu0 %v1671
        %v1673 = vpop.xlane.xlu0 %1672
        %v1674 = vsub.f32 %v1670, %v1673
        %v1675 = vmul.f32 %v1674, 1.442695
        %v1676 = vpow.pop %v1675
        %v1677 = vsel %vm1285, %v1676, 0.0
        %1678 = vadd.xlane.f32.xlu0 %v1677
        %v1679 = vpop.xlane.xlu0 %1678
        %v1680 = vrcp.pop %v1679
        %v1681 = vmul.f32 %v1676, %v1680
        %v1682 = vpack.c.bf16 %v1681, %v1681
        %1683 = vrot.lane.b32.xlu0 %v1281, 40
        %v1684 = vpop.permute.xlu0 %1683
        %v1686 = vsel %vm1285, %v1682, 0
        %v1689 = vsel %vm1351, %v1684, 0
        %1691 = vmatprep.subr.bf16.mxu0 0
        %1692 = vmatpush1.bf16.msra.mxu0 %v1689
        %1693 = vmatprep.subr.bf16.mxu0 0
        %1694 = vmatpush1.bf16.msra.mxu0 0
        %1695 = vmatprep.subr.bf16.mxu0 0
        %1696 = vmatpush1.bf16.msra.mxu0 0
        %1697 = vmatprep.subr.bf16.mxu0 0
        %1698 = vmatpush1.bf16.msra.mxu0 0
        %1699 = vmatprep.subr.bf16.mxu0 0
        %1700 = vmatpush1.bf16.msra.mxu0 0
        %1701 = vmatprep.subr.bf16.mxu0 0
        %1702 = vmatpush1.bf16.msra.mxu0 0
        %1703 = vmatprep.subr.bf16.mxu0 0
        %1704 = vmatpush1.bf16.msra.mxu0 0
        %1705 = vmatprep.subr.bf16.mxu0 0
        %1706 = vmatpush1.bf16.msra.mxu0 0
        %1707 = vmatprep.subr.bf16.mxu0 0
        %1708 = vmatpush1.bf16.msra.mxu0 0
        %1709 = vmatprep.subr.bf16.mxu0 0
        %1710 = vmatpush1.bf16.msra.mxu0 0
        %1711 = vmatprep.subr.bf16.mxu0 0
        %1712 = vmatpush1.bf16.msra.mxu0 0
        %1713 = vmatprep.subr.bf16.mxu0 0
        %1714 = vmatpush1.bf16.msra.mxu0 0
        %1715 = vmatprep.subr.bf16.mxu0 0
        %1716 = vmatpush1.bf16.msra.mxu0 0
        %1717 = vmatprep.subr.bf16.mxu0 0
        %1718 = vmatpush1.bf16.msra.mxu0 0
        %1719 = vmatprep.subr.bf16.mxu0 0
        %1720 = vmatpush1.bf16.msra.mxu0 0
        %1721 = vmatprep.subr.bf16.mxu0 0
        %1722 = vmatpush1.bf16.msra.mxu0 0
        %1723 = vmatprep.mubr.bf16.mxu0 0
        %1724 = vmatmul.mubr.bf16.gmra.mrb[0].mxu0 %v1686
        %v1725 = vpop.f32.mrb[0].mxu0
        %v1726 = vadd.f32 0.0, %v1725
        %v1727 = vpop.f32.mrb[0].mxu0
        %v1728 = vpop.f32.mrb[0].mxu0
        %v1729 = vpop.f32.mrb[0].mxu0
        %1730 = vdwg.mxu0
        %1732 = vrot.lane.b32.xlu0 %v1502, 8
        %v1733 = vpop.permute.xlu0 %1732
        %1736 = vrot.lane.b32.xlu0 %v1614, 16
        %v1737 = vpop.permute.xlu0 %1736
        %1740 = vrot.lane.b32.xlu0 %v1726, 24
        %v1741 = vpop.permute.xlu0 %1740
        %v1743 = vsel %vm1285, %v1390, %v1733
        %vm1744 = vcmask 130048
        %v1745 = vsel %vm1744, %v1743, %v1737
        %vm1746 = vcmask 195584
        %v1747 = vsel %vm1746, %v1745, %v1741
        %v1748 = vpack.c.bf16 %v1747, %v1747
        %v1749 = vld [vmem:[%s11] sm:$0xf]
        %v1750 = vld [vmem:[%s11 + $0x4] sm:$0xf]
        %v1751 = vld [vmem:[%s11 + $0x8] sm:$0xf]
        %v1752 = vld [vmem:[%s11 + $0xc] sm:$0xf]
        %v1753 = vld [vmem:[#allocation10] sm:$0x1]
        %v1755 = vlaneseq
        %v1756 = vshrl.u32 %v1755, 7
        %v1757 = vsub.s32 0, %v1756
        %v1758 = vrot.slane %v1753, %v1757
        %v1764 = vunpack.c.l.b16 %v1749
        %v1765 = vunpack.c.l.b16 %v1750
        %v1766 = vunpack.c.l.b16 %v1751
        %v1767 = vunpack.c.l.b16 %v1752
        %v1768 = vpack.c.b16 %v1765, %v1764
        %v1769 = vpack.c.b16 %v1767, %v1766
        %v1773 = vsel %vm699, %v1748, 0
        %1775 = vmatprep.subr.bf16.mxu0 0
        %1776 = vmatpush1.bf16.msra.mxu0 %v1768
        %1777 = vmatprep.subr.bf16.mxu0 0
        %1778 = vmatpush1.bf16.msra.mxu0 %v1769
        %1779 = vmatprep.subr.bf16.mxu0 0
        %1780 = vmatpush1.bf16.msra.mxu0 0
        %1781 = vmatprep.subr.bf16.mxu0 0
        %1782 = vmatpush1.bf16.msra.mxu0 0
        %1783 = vmatprep.subr.bf16.mxu0 0
        %1784 = vmatpush1.bf16.msra.mxu0 0
        %1785 = vmatprep.subr.bf16.mxu0 0
        %1786 = vmatpush1.bf16.msra.mxu0 0
        %1787 = vmatprep.subr.bf16.mxu0 0
        %1788 = vmatpush1.bf16.msra.mxu0 0
        %1789 = vmatprep.subr.bf16.mxu0 0
        %1790 = vmatpush1.bf16.msra.mxu0 0
        %1791 = vmatprep.subr.bf16.mxu0 0
        %1792 = vmatpush1.bf16.msra.mxu0 0
        %1793 = vmatprep.subr.bf16.mxu0 0
        %1794 = vmatpush1.bf16.msra.mxu0 0
        %1795 = vmatprep.subr.bf16.mxu0 0
        %1796 = vmatpush1.bf16.msra.mxu0 0
        %1797 = vmatprep.subr.bf16.mxu0 0
        %1798 = vmatpush1.bf16.msra.mxu0 0
        %1799 = vmatprep.subr.bf16.mxu0 0
        %1800 = vmatpush1.bf16.msra.mxu0 0
        %1801 = vmatprep.subr.bf16.mxu0 0
        %1802 = vmatpush1.bf16.msra.mxu0 0
        %1803 = vmatprep.subr.bf16.mxu0 0
        %1804 = vmatpush1.bf16.msra.mxu0 0
        %1805 = vmatprep.subr.bf16.mxu0 0
        %1806 = vmatpush1.bf16.msra.mxu0 0
        %1807 = vmatprep.mubr.bf16.mxu0 0
        %1808 = vmatmul.mubr.bf16.gmra.mrb[0].mxu0 %v1773
        %v1809 = vpop.f32.mrb[0].mxu0
        %v1810 = vadd.f32 %v1758, %v1809
        %v1811 = vpop.f32.mrb[0].mxu0
        %v1812 = vpop.f32.mrb[0].mxu0
        %v1813 = vpop.f32.mrb[0].mxu0
        %1814 = vdwg.mxu0
        %v1815 = vadd.f32 %v1174, %v1810
        %v1816 = vld [vmem:[%s13] sm:$0x1]
        %v1817 = vld [vmem:[%s14] sm:$0x1]
        %v1818 = vsel %vm699, %v1815, 0.0
        %1819 = vadd.xlane.f32.xlu0 %v1818
        %v1820 = vpop.xlane.xlu0 %1819
        %v1821 = vmul.f32 %v1820, %v703
        %v1822 = vsub.f32 %v1815, %v1821
        %v1823 = vmul.f32 %v1822, %v1822
        %v1824 = vsel %vm699, %v1823, 0.0
        %1825 = vadd.xlane.f32.xlu0 %v1824
        %v1826 = vpop.xlane.xlu0 %1825
        %v1827 = vmul.f32 %v1826, 0.032258064
        %v1828 = vrsqrt.pop %v1827
        %v1829 = vmul.f32 %v1827, %v1828
        %vm1830 = vcmp.eq.f32.partialorder %v1827, inf
        %v1831 = vsel %vm1830, %v1827, %v1829
        %vm1832 = vcmp.eq.f32.partialorder %v1827, 0.0
        %v1833 = vand.u32 %v1827, 2147483648
        %v1834 = vsel %vm1832, %v1833, %v1831
        %v1835 = vadd.f32 %v1834, 1e-06
        %v1836 = vrcp.pop %v1835
        %v1837 = vmul.f32 %v1822, %v1836
        %v1839 = vlaneseq
        %v1840 = vshrl.u32 %v1839, 7
        %v1841 = vsub.s32 0, %v1840
        %v1842 = vrot.slane %v1816, %v1841
        %v1844 = vmul.f32 %v1842, %v1837
        %v1846 = vlaneseq
        %v1847 = vshrl.u32 %v1846, 7
        %v1848 = vsub.s32 0, %v1847
        %v1849 = vrot.slane %v1817, %v1848
        %v1851 = vadd.f32 %v1844, %v1849
        %v1852 = vpack.c.bf16 %v1851, %v1851
        %v1853 = vld [vmem:[%s15] sm:$0xf]
        %v1854 = vld [vmem:[%s15 + $0x4] sm:$0xf]
        %v1855 = vld [vmem:[%s15 + $0x8] sm:$0xf]
        %v1856 = vld [vmem:[%s15 + $0xc] sm:$0xf]
        %v1857 = vld [vmem:[#allocation11] sm:$0x1]
        %v1859 = vlaneseq
        %v1860 = vshrl.u32 %v1859, 7
        %v1861 = vsub.s32 0, %v1860
        %v1862 = vrot.slane %v1857, %v1861
        %v1868 = vunpack.c.l.b16 %v1853
        %v1869 = vunpack.c.l.b16 %v1854
        %v1870 = vunpack.c.l.b16 %v1855
        %v1871 = vunpack.c.l.b16 %v1856
        %v1872 = vpack.c.b16 %v1869, %v1868
        %v1873 = vpack.c.b16 %v1871, %v1870
        %v1877 = vsel %vm699, %v1852, 0
        %1879 = vmatprep.subr.bf16.mxu0 0
        %1880 = vmatpush1.bf16.msra.mxu0 %v1872
        %1881 = vmatprep.subr.bf16.mxu0 0
        %1882 = vmatpush1.bf16.msra.mxu0 %v1873
        %1883 = vmatprep.subr.bf16.mxu0 0
        %1884 = vmatpush1.bf16.msra.mxu0 0
        %1885 = vmatprep.subr.bf16.mxu0 0
        %1886 = vmatpush1.bf16.msra.mxu0 0
        %1887 = vmatprep.subr.bf16.mxu0 0
        %1888 = vmatpush1.bf16.msra.mxu0 0
        %1889 = vmatprep.subr.bf16.mxu0 0
        %1890 = vmatpush1.bf16.msra.mxu0 0
        %1891 = vmatprep.subr.bf16.mxu0 0
        %1892 = vmatpush1.bf16.msra.mxu0 0
        %1893 = vmatprep.subr.bf16.mxu0 0
        %1894 = vmatpush1.bf16.msra.mxu0 0
        %1895 = vmatprep.subr.bf16.mxu0 0
        %1896 = vmatpush1.bf16.msra.mxu0 0
        %1897 = vmatprep.subr.bf16.mxu0 0
        %1898 = vmatpush1.bf16.msra.mxu0 0
        %1899 = vmatprep.subr.bf16.mxu0 0
        %1900 = vmatpush1.bf16.msra.mxu0 0
        %1901 = vmatprep.subr.bf16.mxu0 0
        %1902 = vmatpush1.bf16.msra.mxu0 0
        %1903 = vmatprep.subr.bf16.mxu0 0
        %1904 = vmatpush1.bf16.msra.mxu0 0
        %1905 = vmatprep.subr.bf16.mxu0 0
        %1906 = vmatpush1.bf16.msra.mxu0 0
        %1907 = vmatprep.subr.bf16.mxu0 0
        %1908 = vmatpush1.bf16.msra.mxu0 0
        %1909 = vmatprep.subr.bf16.mxu0 0
        %1910 = vmatpush1.bf16.msra.mxu0 0
        %1911 = vmatprep.mubr.bf16.mxu0 0
        %1912 = vmatmul.mubr.bf16.gmra.mrb[0].mxu0 %v1877
        %v1913 = vpop.f32.mrb[0].mxu0
        %v1914 = vadd.f32 %v1862, %v1913
        %v1915 = vpop.f32.mrb[0].mxu0
        %v1916 = vpop.f32.mrb[0].mxu0
        %v1917 = vpop.f32.mrb[0].mxu0
        %1918 = vdwg.mxu0
        %v1919 = vmax.f32 %v1914, 0.0
        %v1920 = vpack.c.bf16 %v1919, %v1919
        %v1921 = vld [vmem:[%s17] sm:$0xf]
        %v1922 = vld [vmem:[%s17 + $0x4] sm:$0xf]
        %v1923 = vld [vmem:[%s17 + $0x8] sm:$0xf]
        %v1924 = vld [vmem:[%s17 + $0xc] sm:$0xf]
        %v1925 = vld [vmem:[%s17 + $0x10] sm:$0xf]
        %v1926 = vld [vmem:[%s17 + $0x14] sm:$0xf]
        %v1927 = vld [vmem:[%s17 + $0x18] sm:$0xf]
        %v1928 = vld [vmem:[%s17 + $0x1c] sm:$0xf]
        %v1929 = vld [vmem:[%s17 + $0x20] sm:$0xf]
        %v1930 = vld [vmem:[%s17 + $0x24] sm:$0xf]
        %v1931 = vld [vmem:[%s17 + $0x28] sm:$0xf]
        %v1932 = vld [vmem:[%s17 + $0x2c] sm:$0xf]
        %v1933 = vld [vmem:[%s17 + $0x30] sm:$0xf]
        %v1934 = vld [vmem:[%s17 + $0x34] sm:$0xf]
        %v1935 = vld [vmem:[%s17 + $0x38] sm:$0xf]
        %v1936 = vld [vmem:[%s17 + $0x3c] sm:$0xf]
        %v1937 = vld [vmem:[#allocation13] sm:$0x1]
        %v1939 = vlaneseq
        %v1940 = vshrl.u32 %v1939, 7
        %v1941 = vsub.s32 0, %v1940
        %v1942 = vrot.slane %v1937, %v1941
        %v1960 = vunpack.c.l.b16 %v1921
        %v1961 = vunpack.c.l.b16 %v1922
        %v1962 = vunpack.c.l.b16 %v1923
        %v1963 = vunpack.c.l.b16 %v1924
        %v1964 = vunpack.c.l.b16 %v1925
        %v1965 = vunpack.c.l.b16 %v1926
        %v1966 = vunpack.c.l.b16 %v1927
        %v1967 = vunpack.c.l.b16 %v1928
        %v1968 = vunpack.c.l.b16 %v1929
        %v1969 = vunpack.c.l.b16 %v1930
        %v1970 = vunpack.c.l.b16 %v1931
        %v1971 = vunpack.c.l.b16 %v1932
        %v1972 = vunpack.c.l.b16 %v1933
        %v1973 = vunpack.c.l.b16 %v1934
        %v1974 = vunpack.c.l.b16 %v1935
        %v1975 = vunpack.c.l.b16 %v1936
        %v1976 = vpack.c.b16 %v1961, %v1960
        %v1977 = vpack.c.b16 %v1963, %v1962
        %v1978 = vpack.c.b16 %v1965, %v1964
        %v1979 = vpack.c.b16 %v1967, %v1966
        %v1980 = vpack.c.b16 %v1969, %v1968
        %v1981 = vpack.c.b16 %v1971, %v1970
        %v1982 = vpack.c.b16 %v1973, %v1972
        %v1983 = vpack.c.b16 %v1975, %v1974
        %1992 = vmatprep.subr.bf16.mxu0 0
        %1993 = vmatpush1.bf16.msra.mxu0 %v1976
        %1994 = vmatprep.subr.bf16.mxu0 0
        %1995 = vmatpush1.bf16.msra.mxu0 %v1977
        %1996 = vmatprep.subr.bf16.mxu0 0
        %1997 = vmatpush1.bf16.msra.mxu0 %v1978
        %1998 = vmatprep.subr.bf16.mxu0 0
        %1999 = vmatpush1.bf16.msra.mxu0 %v1979
        %2000 = vmatprep.subr.bf16.mxu0 0
        %2001 = vmatpush1.bf16.msra.mxu0 %v1980
        %2002 = vmatprep.subr.bf16.mxu0 0
        %2003 = vmatpush1.bf16.msra.mxu0 %v1981
        %2004 = vmatprep.subr.bf16.mxu0 0
        %2005 = vmatpush1.bf16.msra.mxu0 %v1982
        %2006 = vmatprep.subr.bf16.mxu0 0
        %2007 = vmatpush1.bf16.msra.mxu0 %v1983
        %2008 = vmatprep.subr.bf16.mxu0 0
        %2009 = vmatpush1.bf16.msra.mxu0 0
        %2010 = vmatprep.subr.bf16.mxu0 0
        %2011 = vmatpush1.bf16.msra.mxu0 0
        %2012 = vmatprep.subr.bf16.mxu0 0
        %2013 = vmatpush1.bf16.msra.mxu0 0
        %2014 = vmatprep.subr.bf16.mxu0 0
        %2015 = vmatpush1.bf16.msra.mxu0 0
        %2016 = vmatprep.subr.bf16.mxu0 0
        %2017 = vmatpush1.bf16.msra.mxu0 0
        %2018 = vmatprep.subr.bf16.mxu0 0
        %2019 = vmatpush1.bf16.msra.mxu0 0
        %2020 = vmatprep.subr.bf16.mxu0 0
        %2021 = vmatpush1.bf16.msra.mxu0 0
        %2022 = vmatprep.subr.bf16.mxu0 0
        %2023 = vmatpush1.bf16.msra.mxu0 0
        %2024 = vmatprep.mubr.bf16.mxu0 0
        %2025 = vmatmul.mubr.bf16.gmra.mrb[0].mxu0 %v1920
        %v2026 = vpop.f32.mrb[0].mxu0
        %v2027 = vadd.f32 %v1942, %v2026
        %v2028 = vpop.f32.mrb[0].mxu0
        %v2029 = vpop.f32.mrb[0].mxu0
        %v2030 = vpop.f32.mrb[0].mxu0
        %2031 = vdwg.mxu0
        %v2032 = vadd.f32 %v1815, %v2027
        %2033 = vst.msk [vmem:[%s692] sm:$0xff] %vm699, %v2032
        %s2034 = sand.u32 %s451, 1
        %s2035 = scalar_lea.sflag [#allocation4], %s2034
        %s2036 = sand.u32 %s451, 1
        %s2037 = smul.addr %s2036, 8
        %s2038 = scalar_lea.vmem [#allocation14], %s2037
        // Predicated region
        $region125: #{block_forward.1} parent=95 // pred_check
          %p2039 = pneg %p461
        $region126: #{block_forward.1} parent=95 // pred_check_branch
          %2041 = sbr.rel (%p2039) target = $region128
        $region127: #{block_forward.1} parent=95 // pred_region
          %s2043 = ssub.s32 128, 128
          %2044 = vsyncadd %s2035, %s2043
          %s2045 = smul.addr %s39, 128
          %s2046 = scalar_lea.hbm %s19, %s2045
          %s2048 = sshll.u32 %s2038, 4
          %s2049 = int_to_ptr.vmem [resolvable:$true] %s2048
          %2051 = dma.vmem_to_hbm [thread:$0]  %s2049, 128, %s2046, %s2035
        $region128: #{block_forward.1} parent=95 // pred_fallthru
          _
      $region96: #{block_forward.1} parent=5 // pred_fallthru
        _
      %p2052 = scmp.le.s32.totalorder 2, %s34
      // Predicated region
      $region129: #{block_forward.1} parent=5 // pred_check
        %p2053 = pneg %p2052
      $region130: #{block_forward.1} parent=5 // pred_check_branch
        %2055 = sbr.rel (%p2053) target = $region132
      $region131: #{block_forward.1} parent=5 // pred_region
        %s2056 = ssub.s32 %s34, 2
        // Predicated region
        $region133: #{block_forward.1} parent=131 // pred_check
          %p2057 = pneg %p467
        $region134: #{block_forward.1} parent=131 // pred_check_branch
          %2059 = sbr.rel (%p2057) target = $region136
        $region135: #{block_forward.1} parent=131 // pred_region
          %s2060 = sand.u32 %s452, 1
          %s2061 = scalar_lea.sflag [#allocation4], %s2060
          %s2062 = sand.u32 %s452, 1
          %s2063 = smul.addr %s2062, 8
          %s2064 = scalar_lea.vmem [#allocation14], %s2063
          %2065 = dma.done %s2061, 128
        $region136: #{block_forward.1} parent=131 // pred_fallthru
          _
      $region132: #{block_forward.1} parent=5 // pred_fallthru
        _
    $region6: #{block_forward.1} parent=1 // loop_footer
      %s38 = sadd.s32 1, %s34
    $region7: #{block_forward.1} parent=1 // loop_footer_branch
      %33 = sbr.rel target = $region3
    $region8: #{block_forward.1} parent=1 // loop_exit
      _
    %2066 = vsyncpa [#allocation3], 1
    %s2067 = scalar_lea.sflag [#allocation3], 1
    %2068 = vsyncpa %s2067, 1
    %2069 = vsyncpa [#allocation6], 1
    %2070 = vsyncpa [#allocation9], 1
    %2071 = vsyncpa [#allocation12], 1
    %2072 = vsyncpa [#allocation4], 1
    %s2073 = scalar_lea.sflag [#allocation4], 1
    %2074 = vsyncpa %s2073, 1

</llo_original>
